<compile_context>
chip_gen: v5e
topology: v5e:2x2
jax: 0.10.0
libtpu: 0.0.40
codegen_flags: <defaults>
</compile_context>

<pallas_src>
import functools
import numpy as np
import jax
import jax.numpy as jnp
from jax.experimental import pallas as pl
from jax.experimental.pallas import tpu as pltpu

# ----------------------- synthetic config (mirrors __init__) -----------------------
N_FACES    = 16     # total graph nodes / faces across the batch
F_IN       = 16     # input node-feature dim
HIDDEN     = 32     # encoder hidden dim
EMBED_DIM  = 32     # vq_cfg.embed_dim
N_CODES    = 128    # vq_cfg.n_embed (codes per level; embed_share=True -> one codebook)
VQ_DEPTH   = 2      # vq_cfg.embed_levels  (vq_depth_factor = 1)
BLOCK_SIZE = 16     # config.block_size
START_TOK, END_TOK, PAD_TOK = 0, 1, 2
PART_TOKEN_OFFSET    = 0
INJECTION_OFFSET     = 0
RQ_TRANSFORMER_INPUT = False     # config.transformer != 'noembed_rq'

# Faces per grid step.  >=512 fills the MXU N-dimension on every generation and
# amortizes per-step overhead; padded tail columns are wasted work that gets
# sliced off on the host (mask/trim the last tile at production sizes).
TILE_N = 512

# MXU operand dtype: bf16 on real TPUs (native MXU path on v5e/v6e/v7x).
# Fall back to f32 when the default backend is not TPU (e.g. CPU interpret
# mode, whose dot executor does not support BF16xBF16=F32).
MXU_DTYPE = jnp.bfloat16 if jax.default_backend() == "tpu" else jnp.float32


# ------------------------------- Pallas kernel --------------------------------------
def _rvq_indices_kernel(xT_ref, wencT_ref, bencT_ref, wpqT_ref, bpqT_ref,
                        cbm2_ref, cbT_ref, cbsq_ref, idx_ref):
    # --- encoder + pre_quant: MXU-dtype operands, f32 accumulation -------------------
    # TODO(synk): the real encoder (get_rvqvae_v0_encoder_vq) is a graph network using
    # edge_index; its architecture is not in the provided source, so a single ReLU-MLP
    # layer stands in here.
    h = jnp.dot(wencT_ref[...], xT_ref[...], preferred_element_type=jnp.float32)
    h = jnp.maximum(h + bencT_ref[...], 0.0)                          # (HIDDEN, tn) f32 VPU
    z = jnp.dot(wpqT_ref[...], h.astype(MXU_DTYPE),
                preferred_element_type=jnp.float32) + bpqT_ref[...]   # (EMBED, tn) f32

    cbm2 = cbm2_ref[...]                                              # (C, E)  = -2*codebook
    cbT  = cbT_ref[...]                                               # (E, C)
    cbsq = cbsq_ref[...]                                              # (C, 1) f32
    c, tn = cbm2.shape[0], z.shape[1]
    # hoisted out of the unrolled per-level loop (JAX does not CSE iotas)
    code_iota = jax.lax.broadcasted_iota(jnp.int32, (c, tn), 0)       # (C, tn)

    residual = z                                                      # (E, tn) f32
    level_idx = []
    for level in range(VQ_DEPTH):        # residual VQ, shared codebook (embed_share=True)
        # argmin_c ||r - c||^2 == argmin_c (||c||^2 - 2 r.c); ||r||^2 is constant
        # per face.  The -2 scale is pre-folded into cbm2.
        scores = jnp.dot(cbm2, residual.astype(MXU_DTYPE),
                         preferred_element_type=jnp.float32)          # (C, tn) = -2*c.r
        dist = cbsq + scores                                          # (C,1) lane-broadcast
        min_d = jnp.min(dist, axis=0, keepdims=True)                  # (1, tn) sublane reduce
        # first minimal index (torch.argmin tie-breaking)
        idx = jnp.min(jnp.where(dist <= min_d, code_iota, c),
                      axis=0, keepdims=True)                          # (1, tn) int32
        level_idx.append(idx)
        if level + 1 < VQ_DEPTH:
            # codebook lookup via onehot matmul (onehot exact in MXU dtype);
            # skipped on the last level since the residual is not used afterwards.
            onehot = (code_iota == idx).astype(MXU_DTYPE)             # (C, tn)
            residual = residual - jnp.dot(cbT, onehot,
                                          preferred_element_type=jnp.float32)
    # single full-block, lane-dense store (no per-level masked sub-sublane writes)
    idx_ref[...] = jnp.concatenate(level_idx, axis=0)


@functools.partial(jax.jit, static_argnames=("tile_n",))
def rvq_get_indices(x, w_enc, b_enc, w_pq, b_pq, codebook, *, tile_n=TILE_N):
    """encoder -> pre_quant -> residual-VQ indices, fused in one Pallas kernel."""
    n, f_in = x.shape
    hidden  = w_enc.shape[1]
    embed   = w_pq.shape[1]
    n_codes = codebook.shape[0]
    n_pad   = ((n + tile_n - 1) // tile_n) * tile_n

    # Layout plumbing in XLA (one-time, outside the grid): faces -> lane axis,
    # weights pre-transposed and cast to the MXU operand dtype (f32 accumulate
    # in-kernel), -2 scale folded into the codebook, ||c||^2 precomputed.
    xT    = jnp.pad(x.T.astype(MXU_DTYPE), ((0, 0), (0, n_pad - n)))
    wencT = w_enc.T.astype(MXU_DTYPE)
    wpqT  = w_pq.T.astype(MXU_DTYPE)
    bencT = b_enc.reshape(hidden, 1).astype(jnp.float32)
    bpqT  = b_pq.reshape(embed, 1).astype(jnp.float32)
    cb_f32 = codebook.astype(jnp.float32)
    cbm2  = (-2.0 * cb_f32).astype(MXU_DTYPE)                         # exact power-of-two scale
    cbT   = cb_f32.T.astype(MXU_DTYPE)
    cb_sq = jnp.sum(cb_f32 * cb_f32, axis=-1, keepdims=True)          # (C, 1) f32

    def bcast(shape):
        return pl.BlockSpec(shape, lambda i: (0,) * len(shape))

    idx_t = pl.pallas_call(
        _rvq_indices_kernel,
        out_shape=jax.ShapeDtypeStruct((VQ_DEPTH, n_pad), jnp.int32),
        grid_spec=pltpu.PrefetchScalarGridSpec(
            num_scalar_prefetch=0,
            grid=(n_pad // tile_n,),
            in_specs=[
                pl.BlockSpec((f_in, tile_n), lambda i: (0, i)),       # xT: tiled over faces
                bcast((hidden, f_in)),                                # w_encT
                bcast((hidden, 1)),                                   # b_encT
                bcast((embed, hidden)),                               # w_pqT
                bcast((embed, 1)),                                    # b_pqT
                bcast((n_codes, embed)),                              # cbm2 (= -2*cb)
                bcast((embed, n_codes)),                              # cbT
                bcast((n_codes, 1)),                                  # cb_sq
            ],
            out_specs=pl.BlockSpec((VQ_DEPTH, tile_n), lambda i: (0, i)),
        ),
        compiler_params=pltpu.CompilerParams(
            dimension_semantics=("parallel",),      # shard face tiles across v7x's 2 TCs
            vmem_limit_bytes=48 * 1024 * 1024,      # <=48 MiB: safe on v7x's 64 MiB VMEM
        ),
    )(xT, wencT, bencT, wpqT, bpqT, cbm2, cbT, cb_sq)
    return idx_t[:, :n].T                                             # (n, VQ_DEPTH)


# ------------------------------ host-side glue --------------------------------------
def get_shifted_sequence(sequence):
    # Helper from the original codebase (not included in the provided source):
    # shift non-special outer-face ids so the first non-special value becomes 3.
    sequence = np.array(sequence, copy=True)
    non_special = np.flatnonzero(~np.isin(sequence, [START_TOK, END_TOK, PAD_TOK]))
    if non_special.shape[0] > 0:
        val = sequence[non_special[0]]
        sequence[non_special] -= (val - 3)
    return sequence


def quantized_soup_forward(params, x, edge_index, batch, faces, num_vertices, js,
                           force_full_sequence=False):
    """Mirrors QuantizedSoupCreator.forward (non-rq path, injection_offset >= 0).

    The per-mesh splicing uses data-dependent lengths, so (like the torch loop)
    it requires a device->host sync on the indices before the bookkeeping.
    """
    del edge_index, faces, num_vertices  # unused by the synthetic encoder (see TODO in kernel)
    all_indices = np.asarray(
        rvq_get_indices(x, params["w_enc"], params["b_enc"],
                        params["w_pq"], params["b_pq"], params["codebook"]))
    batch_np = np.asarray(batch)
    js_np = np.asarray(js)
    batch_size = js_np.shape[0]
    D = VQ_DEPTH  # vq_depth * vq_depth_factor

    sequences, targets, position_inners, position_outers = [], [], [], []
    max_sequence_length_x = 0
    for k in range(batch_size):
        sel = all_indices[batch_np == k, :]                       # (n_k, D)
        n_k = sel.shape[0]
        inner = np.tile(np.arange(D)[None, :], (n_k, 1)).reshape(-1) + 3 + PART_TOKEN_OFFSET
        outer = np.tile(np.arange(n_k)[:, None], (1, D)).reshape(-1) + 3 + PART_TOKEN_OFFSET
        seq = sel.reshape(-1) + 3 + PART_TOKEN_OFFSET
        # non-rq path: wrap with start / end tokens
        seq = np.concatenate(([START_TOK], seq, [END_TOK])).astype(np.int64)
        inner = np.concatenate(([START_TOK], inner, [END_TOK])).astype(np.int64)
        outer = np.concatenate(([START_TOK], outer, [END_TOK])).astype(np.int64)

        j = int(js_np[k])
        end_index = len(seq) if force_full_sequence else min(j + BLOCK_SIZE, len(seq))
        x_in = seq[j:end_index]
        y_in = seq[j + 1:end_index + 1]
        fpi_in = inner[j:end_index]
        fpo_in = outer[j:end_index]
        max_sequence_length_x = max(max_sequence_length_x, len(x_in) + INJECTION_OFFSET + 5)

        pad_len_x = BLOCK_SIZE - len(x_in)
        x_pad = np.full(pad_len_x, PAD_TOK, dtype=np.int64)
        pad_len_y = len(x_in) + len(x_pad) - len(y_in)
        pad_len_fpi = BLOCK_SIZE - len(fpi_in)
        pad_len_fpo = BLOCK_SIZE - len(fpo_in)
        y_pad = np.full(pad_len_y, PAD_TOK, dtype=np.int64)
        fpi_pad = np.full(pad_len_fpi, PAD_TOK, dtype=np.int64)
        fpo_pad = np.full(pad_len_fpo, PAD_TOK, dtype=np.int64)

        sequences.append(np.concatenate((x_in, x_pad)).astype(np.int64))
        targets.append(np.concatenate((y_in, y_pad)).astype(np.int64))
        position_inners.append(np.concatenate((fpi_in, fpi_pad)).astype(np.int64))
        position_outers.append(get_shifted_sequence(
            np.concatenate((fpo_in, fpo_pad))).astype(np.int64))

    sequences = np.stack(sequences, axis=0)
    targets = np.stack(targets, axis=0)
    position_inners = np.stack(position_inners, axis=0)
    position_outers = np.stack(position_outers, axis=0)
    if INJECTION_OFFSET >= 0:
        sequences = sequences[:, :max_sequence_length_x]
        targets = targets[:, :max_sequence_length_x]
        position_inners = position_inners[:, :max_sequence_length_x]
        position_outers = position_outers[:, :max_sequence_length_x]
    return (jnp.asarray(sequences, dtype=jnp.int32),
            jnp.asarray(targets, dtype=jnp.int32),
            jnp.asarray(position_inners, dtype=jnp.int32),
            jnp.asarray(position_outers, dtype=jnp.int32))


# ------------------------------ reference check -------------------------------------
def _mxu_round(a):
    """Mirror the kernel's MXU-operand cast (no-op when MXU_DTYPE is f32)."""
    return np.asarray(jnp.asarray(np.asarray(a), jnp.float32)
                      .astype(MXU_DTYPE).astype(jnp.float32))


def _check_indices(params, x, idx_kernel, tol=0.5):
    """Every kernel-selected code must be within `tol` of the best true squared
    distance along the kernel's own (MXU-dtype-rounded) residual path.  The
    tolerance absorbs bf16 operand rounding / near-tie flips; gross errors
    (wrong codes) are off by >> tol."""
    xq = _mxu_round(x).astype(np.float64)
    we = _mxu_round(params["w_enc"]).astype(np.float64)
    wp = _mxu_round(params["w_pq"]).astype(np.float64)
    be = np.asarray(params["b_enc"], np.float64).reshape(-1)
    bp = np.asarray(params["b_pq"], np.float64).reshape(-1)
    cb_exact = np.asarray(params["codebook"], np.float64)
    cb_kernel = _mxu_round(params["codebook"]).astype(np.float64)   # kernel lookup path

    h = np.maximum(xq @ we + be, 0.0)
    z = _mxu_round(h).astype(np.float64) @ wp + bp
    residual = z.copy()
    rows = np.arange(x.shape[0])
    for level in range(VQ_DEPTH):
        dist = ((residual[:, None, :] - cb_exact[None, :, :]) ** 2).sum(-1)
        chosen = idx_kernel[:, level]
        if not np.all(dist[rows, chosen] <= dist.min(-1) + tol):
            return False
        residual = residual - cb_kernel[chosen]
    return True


# ------------------------------------ main -------------------------------------------
if __name__ == "__main__":
    key = jax.random.PRNGKey(0)
    k_x, k_we, k_be, k_wp, k_bp, k_cb = jax.random.split(key, 6)

    # deterministic "parameters" (encoder, pre_quant, shared RVQ codebook)
    params = {
        "w_enc":    jax.random.normal(k_we, (F_IN, HIDDEN), jnp.float32) * 0.1,
        "b_enc":    jax.random.normal(k_be, (1, HIDDEN), jnp.float32) * 0.01,
        "w_pq":     jax.random.normal(k_wp, (HIDDEN, EMBED_DIM), jnp.float32) * 0.1,
        "b_pq":     jax.random.normal(k_bp, (1, EMBED_DIM), jnp.float32) * 0.01,
        "codebook": jax.random.normal(k_cb, (N_CODES, EMBED_DIM), jnp.float32),
    }

    # inputs: node features, (unused) edge_index/faces/num_vertices, batch ids, js
    x = jax.random.normal(k_x, (N_FACES, F_IN), jnp.float32)
    edge_index = jnp.zeros((2, 32), jnp.int32)
    batch = jnp.concatenate([jnp.zeros((8,), jnp.int32), jnp.ones((8,), jnp.int32)])
    faces = jnp.zeros((N_FACES, 3), jnp.int32)
    num_vertices = jnp.array([N_FACES], jnp.int32)
    js = jnp.array([0, 2], jnp.int32)

    # sanity-check the Pallas RVQ kernel against a numpy reference
    idx_kernel = np.asarray(rvq_get_indices(x, params["w_enc"], params["b_enc"],
                                            params["w_pq"], params["b_pq"],
                                            params["codebook"]))
    assert idx_kernel.shape == (N_FACES, VQ_DEPTH)
    assert _check_indices(params, x, idx_kernel), \
        "RVQ index mismatch vs reference beyond fp tolerance"

    seqs, tgts, pis, pos = quantized_soup_forward(
        params, x, edge_index, batch, faces, num_vertices, js)
    jax.block_until_ready((seqs, tgts, pis, pos))
    print("KERNEL_OK")
</pallas_src>

<mosaic_0001>
module attributes {stable_mosaic.version = 11 : i64} {
  func.func @_rvq_indices_kernel(%arg0: i32, %arg1: memref<16x512xf32, #tpu.memory_space<vmem>>, %arg2: memref<32x16xf32, #tpu.memory_space<vmem>>, %arg3: memref<32x1xf32, #tpu.memory_space<vmem>>, %arg4: memref<32x32xf32, #tpu.memory_space<vmem>>, %arg5: memref<32x1xf32, #tpu.memory_space<vmem>>, %arg6: memref<128x32xf32, #tpu.memory_space<vmem>>, %arg7: memref<32x128xf32, #tpu.memory_space<vmem>>, %arg8: memref<128x1xf32, #tpu.memory_space<vmem>>, %arg9: memref<2x512xi32, #tpu.memory_space<vmem>>) attributes {dimension_semantics = [#tpu.dimension_semantics<parallel>], iteration_bounds = array<i64: 1>, scalar_prefetch = 0 : i64, scratch_operands = 0 : i64, tpu.core_type = #tpu.core_type<tc>, window_params = [{transform_indices = @transform_0, window_bounds = array<i64: 16, 512>}, {pipeline_mode = #tpu.pipeline_mode<synchronous>, transform_indices = @transform_1, window_bounds = array<i64: 32, 16>}, {pipeline_mode = #tpu.pipeline_mode<synchronous>, transform_indices = @transform_2, window_bounds = array<i64: 32, 1>}, {pipeline_mode = #tpu.pipeline_mode<synchronous>, transform_indices = @transform_3, window_bounds = array<i64: 32, 32>}, {pipeline_mode = #tpu.pipeline_mode<synchronous>, transform_indices = @transform_4, window_bounds = array<i64: 32, 1>}, {pipeline_mode = #tpu.pipeline_mode<synchronous>, transform_indices = @transform_5, window_bounds = array<i64: 128, 32>}, {pipeline_mode = #tpu.pipeline_mode<synchronous>, transform_indices = @transform_6, window_bounds = array<i64: 32, 128>}, {pipeline_mode = #tpu.pipeline_mode<synchronous>, transform_indices = @transform_7, window_bounds = array<i64: 128, 1>}, {transform_indices = @transform_8, window_bounds = array<i64: 2, 512>}]} {
    %c0 = arith.constant 0 : index
    %c0_0 = arith.constant 0 : index
    %0 = vector.load %arg2[%c0, %c0_0] : memref<32x16xf32, #tpu.memory_space<vmem>>, vector<32x16xf32>
    %c0_1 = arith.constant 0 : index
    %c0_2 = arith.constant 0 : index
    %1 = vector.load %arg1[%c0_1, %c0_2] : memref<16x512xf32, #tpu.memory_space<vmem>>, vector<16x512xf32>
    %cst = arith.constant dense<0.000000e+00> : vector<32x512xf32>
    %2 = tpu.matmul %0, %1, %cst {dimension_numbers = #tpu.dot_dimension_numbers<[1], [0], [0], [1], [0, 0, 1, 1], [], []>} : vector<32x16xf32>, vector<16x512xf32>, vector<32x512xf32> -> vector<32x512xf32>
    %c0_3 = arith.constant 0 : index
    %c0_4 = arith.constant 0 : index
    %3 = vector.load %arg3[%c0_3, %c0_4] : memref<32x1xf32, #tpu.memory_space<vmem>>, vector<32x1xf32>
    %4 = vector.broadcast %3 : vector<32x1xf32> to vector<32x512xf32>
    %5 = arith.addf %2, %4 : vector<32x512xf32>
    %cst_5 = arith.constant 0.000000e+00 : f32
    %6 = vector.broadcast %cst_5 : f32 to vector<32x512xf32>
    %7 = arith.maximumf %5, %6 : vector<32x512xf32>
    %c0_6 = arith.constant 0 : index
    %c0_7 = arith.constant 0 : index
    %8 = vector.load %arg4[%c0_6, %c0_7] : memref<32x32xf32, #tpu.memory_space<vmem>>, vector<32x32xf32>
    %cst_8 = arith.constant dense<0.000000e+00> : vector<32x512xf32>
    %9 = tpu.matmul %8, %7, %cst_8 {dimension_numbers = #tpu.dot_dimension_numbers<[1], [0], [0], [1], [0, 0, 1, 1], [], []>} : vector<32x32xf32>, vector<32x512xf32>, vector<32x512xf32> -> vector<32x512xf32>
    %c0_9 = arith.constant 0 : index
    %c0_10 = arith.constant 0 : index
    %10 = vector.load %arg5[%c0_9, %c0_10] : memref<32x1xf32, #tpu.memory_space<vmem>>, vector<32x1xf32>
    %11 = vector.broadcast %10 : vector<32x1xf32> to vector<32x512xf32>
    %12 = arith.addf %9, %11 : vector<32x512xf32>
    %c0_11 = arith.constant 0 : index
    %c0_12 = arith.constant 0 : index
    %13 = vector.load %arg6[%c0_11, %c0_12] : memref<128x32xf32, #tpu.memory_space<vmem>>, vector<128x32xf32>
    %c0_13 = arith.constant 0 : index
    %c0_14 = arith.constant 0 : index
    %14 = vector.load %arg7[%c0_13, %c0_14] : memref<32x128xf32, #tpu.memory_space<vmem>>, vector<32x128xf32>
    %c0_15 = arith.constant 0 : index
    %c0_16 = arith.constant 0 : index
    %15 = vector.load %arg8[%c0_15, %c0_16] : memref<128x1xf32, #tpu.memory_space<vmem>>, vector<128x1xf32>
    %16 = tpu.iota {dimensions = array<i32: 0>} : vector<128x512xi32>
    %cst_17 = arith.constant dense<0.000000e+00> : vector<128x512xf32>
    %17 = tpu.matmul %13, %12, %cst_17 {dimension_numbers = #tpu.dot_dimension_numbers<[1], [0], [0], [1], [0, 0, 1, 1], [], []>} : vector<128x32xf32>, vector<32x512xf32>, vector<128x512xf32> -> vector<128x512xf32>
    %18 = vector.broadcast %15 : vector<128x1xf32> to vector<128x512xf32>
    %19 = arith.addf %18, %17 : vector<128x512xf32>
    %cst_18 = arith.constant dense<0x7F800000> : vector<512xf32>
    %20 = vector.multi_reduction <minimumf>, %19, %cst_18 [0] : vector<128x512xf32> to vector<512xf32>
    %21 = vector.shape_cast %20 : vector<512xf32> to vector<1x512xf32>
    %22 = vector.broadcast %21 : vector<1x512xf32> to vector<128x512xf32>
    %23 = arith.cmpf ole, %19, %22 : vector<128x512xf32>
    %c128_i32 = arith.constant 128 : i32
    %24 = vector.broadcast %c128_i32 : i32 to vector<128x512xi32>
    %25 = arith.select %23, %16, %24 : vector<128x512xi1>, vector<128x512xi32>
    %cst_19 = arith.constant dense<2147483647> : vector<512xi32>
    %26 = vector.multi_reduction <minsi>, %25, %cst_19 [0] : vector<128x512xi32> to vector<512xi32>
    %27 = vector.shape_cast %26 : vector<512xi32> to vector<1x512xi32>
    %28 = vector.broadcast %27 : vector<1x512xi32> to vector<128x512xi32>
    %29 = arith.cmpi eq, %16, %28 : vector<128x512xi32>
    %30 = arith.extui %29 : vector<128x512xi1> to vector<128x512xi32>
    %31 = arith.sitofp %30 : vector<128x512xi32> to vector<128x512xf32>
    %cst_20 = arith.constant dense<0.000000e+00> : vector<32x512xf32>
    %32 = tpu.matmul %14, %31, %cst_20 {dimension_numbers = #tpu.dot_dimension_numbers<[1], [0], [0], [1], [0, 0, 1, 1], [], []>} : vector<32x128xf32>, vector<128x512xf32>, vector<32x512xf32> -> vector<32x512xf32>
    %33 = arith.subf %12, %32 : vector<32x512xf32>
    %cst_21 = arith.constant dense<0.000000e+00> : vector<128x512xf32>
    %34 = tpu.matmul %13, %33, %cst_21 {dimension_numbers = #tpu.dot_dimension_numbers<[1], [0], [0], [1], [0, 0, 1, 1], [], []>} : vector<128x32xf32>, vector<32x512xf32>, vector<128x512xf32> -> vector<128x512xf32>
    %35 = vector.broadcast %15 : vector<128x1xf32> to vector<128x512xf32>
    %36 = arith.addf %35, %34 : vector<128x512xf32>
    %cst_22 = arith.constant dense<0x7F800000> : vector<512xf32>
    %37 = vector.multi_reduction <minimumf>, %36, %cst_22 [0] : vector<128x512xf32> to vector<512xf32>
    %38 = vector.shape_cast %37 : vector<512xf32> to vector<1x512xf32>
    %39 = vector.broadcast %38 : vector<1x512xf32> to vector<128x512xf32>
    %40 = arith.cmpf ole, %36, %39 : vector<128x512xf32>
    %c128_i32_23 = arith.constant 128 : i32
    %41 = vector.broadcast %c128_i32_23 : i32 to vector<128x512xi32>
    %42 = arith.select %40, %16, %41 : vector<128x512xi1>, vector<128x512xi32>
    %cst_24 = arith.constant dense<2147483647> : vector<512xi32>
    %43 = vector.multi_reduction <minsi>, %42, %cst_24 [0] : vector<128x512xi32> to vector<512xi32>
    %44 = vector.shape_cast %43 : vector<512xi32> to vector<1x512xi32>
    %45 = tpu.concatenate %27, %44 in 0 : vector<1x512xi32>, vector<1x512xi32> -> vector<2x512xi32>
    %c0_25 = arith.constant 0 : index
    %c0_26 = arith.constant 0 : index
    %46 = vector.load %arg9[%c0_25, %c0_26] : memref<2x512xi32, #tpu.memory_space<vmem>>, vector<2x512xi32>
    tpu.vector_store %arg9[%c0_25, %c0_26], %45 {strides = array<i32>} : memref<2x512xi32, #tpu.memory_space<vmem>>, vector<2x512xi32>,
    return
  }
  func.func @transform_0(%arg0: i32) -> (i32, i32) {
    %c0_i32 = arith.constant 0 : i32
    %c0_i32_0 = arith.constant 0 : i32
    return %c0_i32, %arg0 : i32, i32
  }
  func.func @transform_1(%arg0: i32) -> (i32, i32) {
    %c0_i32 = arith.constant 0 : i32
    %c0_i32_0 = arith.constant 0 : i32
    %c0_i32_1 = arith.constant 0 : i32
    return %c0_i32, %c0_i32_0 : i32, i32
  }
  func.func @transform_2(%arg0: i32) -> (i32, i32) {
    %c0_i32 = arith.constant 0 : i32
    %c0_i32_0 = arith.constant 0 : i32
    %c0_i32_1 = arith.constant 0 : i32
    return %c0_i32, %c0_i32_0 : i32, i32
  }
  func.func @transform_3(%arg0: i32) -> (i32, i32) {
    %c0_i32 = arith.constant 0 : i32
    %c0_i32_0 = arith.constant 0 : i32
    %c0_i32_1 = arith.constant 0 : i32
    return %c0_i32, %c0_i32_0 : i32, i32
  }
  func.func @transform_4(%arg0: i32) -> (i32, i32) {
    %c0_i32 = arith.constant 0 : i32
    %c0_i32_0 = arith.constant 0 : i32
    %c0_i32_1 = arith.constant 0 : i32
    return %c0_i32, %c0_i32_0 : i32, i32
  }
  func.func @transform_5(%arg0: i32) -> (i32, i32) {
    %c0_i32 = arith.constant 0 : i32
    %c0_i32_0 = arith.constant 0 : i32
    %c0_i32_1 = arith.constant 0 : i32
    return %c0_i32, %c0_i32_0 : i32, i32
  }
  func.func @transform_6(%arg0: i32) -> (i32, i32) {
    %c0_i32 = arith.constant 0 : i32
    %c0_i32_0 = arith.constant 0 : i32
    %c0_i32_1 = arith.constant 0 : i32
    return %c0_i32, %c0_i32_0 : i32, i32
  }
  func.func @transform_7(%arg0: i32) -> (i32, i32) {
    %c0_i32 = arith.constant 0 : i32
    %c0_i32_0 = arith.constant 0 : i32
    %c0_i32_1 = arith.constant 0 : i32
    return %c0_i32, %c0_i32_0 : i32, i32
  }
  func.func @transform_8(%arg0: i32) -> (i32, i32) {
    %c0_i32 = arith.constant 0 : i32
    %c0_i32_0 = arith.constant 0 : i32
    return %c0_i32, %arg0 : i32, i32
  }
}

</mosaic_0001>

<llo_original>
// kernel: rvq_get_indices.1
$region0: #{rvq_get_indices.1}
  #allocation0 [shape = 'u32[]', space=smem, size = 0x4, offset = 0x4, fixed_abs, tag = 'smem constant byte address 0x4 - core index']
  #allocation1 [shape = 'u32[72,128]{1,0:T(1,128)}', space=vmem, size = 0x9000, scoped, tag = 'internal scratch']
  %s0 = inlined_call_operand.vmem [shape: f32[16,512], index: 0, kind: input, shape index: {}]
  %s1 = inlined_call_operand.vmem [shape: f32[32,16], index: 1, kind: input, shape index: {}]
  %s2 = inlined_call_operand.vmem [shape: f32[32,1], index: 2, kind: input, shape index: {}]
  %s3 = inlined_call_operand.vmem [shape: f32[32,32], index: 3, kind: input, shape index: {}]
  %s4 = inlined_call_operand.vmem [shape: f32[32,1], index: 4, kind: input, shape index: {}]
  %s5 = inlined_call_operand.vmem [shape: f32[128,32], index: 5, kind: input, shape index: {}]
  %s6 = inlined_call_operand.vmem [shape: f32[32,128], index: 6, kind: input, shape index: {}]
  %s7 = inlined_call_operand.vmem [shape: f32[128,1], index: 7, kind: input, shape index: {}]
  %s8 = inlined_call_operand.vmem [shape: s32[2,512], index: 8, kind: output, shape index: {}]
  %s9 = sld [smem:[#allocation0]]
  $region42: #{rvq_get_indices.1} parent=0
    _
  %s11 = ssub.s32 1, %s9
  %s12 = scalar_select 0, %s11, %s9
  // Predicated region
  $region2: #{rvq_get_indices.1} parent=0 // pred_check
    _
  $region3: #{rvq_get_indices.1} parent=0 // pred_check_branch
    %14 = sbr.rel (0) target = $region5
  $region4: #{rvq_get_indices.1} parent=0 // pred_region
    _
  $region5: #{rvq_get_indices.1} parent=0 // pred_fallthru
    _
  // Predicated region
  $region6: #{rvq_get_indices.1} parent=0 // pred_check
    _
  $region7: #{rvq_get_indices.1} parent=0 // pred_check_branch
    %16 = sbr.rel (0) target = $region9
  $region8: #{rvq_get_indices.1} parent=0 // pred_region
    _
  $region9: #{rvq_get_indices.1} parent=0 // pred_fallthru
    _
  // Predicated region
  $region10: #{rvq_get_indices.1} parent=0 // pred_check
    _
  $region11: #{rvq_get_indices.1} parent=0 // pred_check_branch
    %18 = sbr.rel (0) target = $region13
  $region12: #{rvq_get_indices.1} parent=0 // pred_region
    _
  $region13: #{rvq_get_indices.1} parent=0 // pred_fallthru
    _
  // Predicated region
  $region14: #{rvq_get_indices.1} parent=0 // pred_check
    _
  $region15: #{rvq_get_indices.1} parent=0 // pred_check_branch
    %20 = sbr.rel (0) target = $region17
  $region16: #{rvq_get_indices.1} parent=0 // pred_region
    _
  $region17: #{rvq_get_indices.1} parent=0 // pred_fallthru
    _
  // Predicated region
  $region18: #{rvq_get_indices.1} parent=0 // pred_check
    _
  $region19: #{rvq_get_indices.1} parent=0 // pred_check_branch
    %22 = sbr.rel (0) target = $region21
  $region20: #{rvq_get_indices.1} parent=0 // pred_region
    _
  $region21: #{rvq_get_indices.1} parent=0 // pred_fallthru
    _
  // Predicated region
  $region22: #{rvq_get_indices.1} parent=0 // pred_check
    _
  $region23: #{rvq_get_indices.1} parent=0 // pred_check_branch
    %24 = sbr.rel (0) target = $region25
  $region24: #{rvq_get_indices.1} parent=0 // pred_region
    _
  $region25: #{rvq_get_indices.1} parent=0 // pred_fallthru
    _
  // Predicated region
  $region26: #{rvq_get_indices.1} parent=0 // pred_check
    _
  $region27: #{rvq_get_indices.1} parent=0 // pred_check_branch
    %26 = sbr.rel (0) target = $region29
  $region28: #{rvq_get_indices.1} parent=0 // pred_region
    _
  $region29: #{rvq_get_indices.1} parent=0 // pred_fallthru
    _
  // Predicated region
  $region30: #{rvq_get_indices.1} parent=0 // pred_check
    _
  $region31: #{rvq_get_indices.1} parent=0 // pred_check_branch
    %28 = sbr.rel (0) target = $region33
  $region32: #{rvq_get_indices.1} parent=0 // pred_region
    _
  $region33: #{rvq_get_indices.1} parent=0 // pred_fallthru
    _
  %v29 = vld [vmem:[%s1] sm:$0xff]
  %v30 = vld [vmem:[%s1 + $0x8] sm:$0xff]
  %v31 = vld [vmem:[%s1 + $0x10] sm:$0xff]
  %v32 = vld [vmem:[%s1 + $0x18] sm:$0xff]
  %v33 = vld [vmem:[%s0] sm:$0xff]
  %v34 = vld [vmem:[%s0 + $0x8] sm:$0xff]
  %v35 = vld [vmem:[%s0 + $0x10] sm:$0xff]
  %v36 = vld [vmem:[%s0 + $0x18] sm:$0xff]
  %v37 = vld [vmem:[%s0 + $0x20] sm:$0xff]
  %v38 = vld [vmem:[%s0 + $0x28] sm:$0xff]
  %v39 = vld [vmem:[%s0 + $0x30] sm:$0xff]
  %v40 = vld [vmem:[%s0 + $0x38] sm:$0xff]
  %v41 = vld [vmem:[%s2] sm:$0xff]
  %v42 = vld [vmem:[%s2 + $0x8] sm:$0xff]
  %v43 = vld [vmem:[%s2 + $0x10] sm:$0xff]
  %v44 = vld [vmem:[%s2 + $0x18] sm:$0xff]
  %46 = vset.pattern.permute.xlu0 0
  %47 = vperm.xlu0 %46, %v41
  %v48 = vpop.permute.xlu0 %47
  %51 = vset.pattern.permute.xlu0 0
  %52 = vperm.xlu0 %51, %v42
  %v53 = vpop.permute.xlu0 %52
  %56 = vset.pattern.permute.xlu0 0
  %57 = vperm.xlu0 %56, %v43
  %v58 = vpop.permute.xlu0 %57
  %61 = vset.pattern.permute.xlu0 0
  %62 = vperm.xlu0 %61, %v44
  %v63 = vpop.permute.xlu0 %62
  %vm65 = vcmask 130048
  %v67 = vsel %vm65, %v29, 0
  %v70 = vsel %vm65, %v30, 0
  %v73 = vsel %vm65, %v31, 0
  %v76 = vsel %vm65, %v32, 0
  %78 = vmatpush.msra.mxu0 0.0
  %79 = vmatpush.msra.mxu0 0.0
  %80 = vmatpush.msra.mxu0 0.0
  %81 = vmatpush.msra.mxu0 0.0
  %82 = vmatpush.msra.mxu0 0.0
  %83 = vmatpush.msra.mxu0 0.0
  %84 = vmatpush.msra.mxu0 0.0
  %85 = vmatpush.msra.mxu0 0.0
  %86 = vmatpush.msra.mxu0 0.0
  %87 = vmatpush.msra.mxu0 0.0
  %88 = vmatpush.msra.mxu0 0.0
  %89 = vmatpush.msra.mxu0 0.0
  %90 = vmatpush.msra.mxu0 0.0
  %91 = vmatpush.msra.mxu0 0.0
  %92 = vmatpush.msra.mxu0 %v37
  %93 = vmatpush.msra.mxu0 %v33
  %94 = vmatmul.f32.gmra.mxu0 %v67
  %v95 = vpop.f32.mrf.mxu0
  %v96 = vadd.f32 %v48, %v95
  %97 = vmatmul.f32.gmra.mxu0 %v70
  %v98 = vpop.f32.mrf.mxu0
  %v99 = vadd.f32 %v53, %v98
  %100 = vmatmul.f32.gmra.mxu0 %v73
  %v101 = vpop.f32.mrf.mxu0
  %v102 = vadd.f32 %v58, %v101
  %103 = vmatmul.f32.gmra.mxu0 %v76
  %v104 = vpop.f32.mrf.mxu0
  %v105 = vadd.f32 %v63, %v104
  %106 = vdwg.mxu0
  %107 = vmatpush.msra.mxu0 0.0
  %108 = vmatpush.msra.mxu0 0.0
  %109 = vmatpush.msra.mxu0 0.0
  %110 = vmatpush.msra.mxu0 0.0
  %111 = vmatpush.msra.mxu0 0.0
  %112 = vmatpush.msra.mxu0 0.0
  %113 = vmatpush.msra.mxu0 0.0
  %114 = vmatpush.msra.mxu0 0.0
  %115 = vmatpush.msra.mxu0 0.0
  %116 = vmatpush.msra.mxu0 0.0
  %117 = vmatpush.msra.mxu0 0.0
  %118 = vmatpush.msra.mxu0 0.0
  %119 = vmatpush.msra.mxu0 0.0
  %120 = vmatpush.msra.mxu0 0.0
  %121 = vmatpush.msra.mxu0 %v38
  %122 = vmatpush.msra.mxu0 %v34
  %123 = vmatmul.f32.gmra.mxu0 %v67
  %v124 = vpop.f32.mrf.mxu0
  %v125 = vadd.f32 %v48, %v124
  %126 = vmatmul.f32.gmra.mxu0 %v70
  %v127 = vpop.f32.mrf.mxu0
  %v128 = vadd.f32 %v53, %v127
  %129 = vmatmul.f32.gmra.mxu0 %v73
  %v130 = vpop.f32.mrf.mxu0
  %v131 = vadd.f32 %v58, %v130
  %132 = vmatmul.f32.gmra.mxu0 %v76
  %v133 = vpop.f32.mrf.mxu0
  %v134 = vadd.f32 %v63, %v133
  %135 = vdwg.mxu0
  %136 = vmatpush.msra.mxu0 0.0
  %137 = vmatpush.msra.mxu0 0.0
  %138 = vmatpush.msra.mxu0 0.0
  %139 = vmatpush.msra.mxu0 0.0
  %140 = vmatpush.msra.mxu0 0.0
  %141 = vmatpush.msra.mxu0 0.0
  %142 = vmatpush.msra.mxu0 0.0
  %143 = vmatpush.msra.mxu0 0.0
  %144 = vmatpush.msra.mxu0 0.0
  %145 = vmatpush.msra.mxu0 0.0
  %146 = vmatpush.msra.mxu0 0.0
  %147 = vmatpush.msra.mxu0 0.0
  %148 = vmatpush.msra.mxu0 0.0
  %149 = vmatpush.msra.mxu0 0.0
  %150 = vmatpush.msra.mxu0 %v39
  %151 = vmatpush.msra.mxu0 %v35
  %152 = vmatmul.f32.gmra.mxu0 %v67
  %v153 = vpop.f32.mrf.mxu0
  %v154 = vadd.f32 %v48, %v153
  %155 = vmatmul.f32.gmra.mxu0 %v70
  %v156 = vpop.f32.mrf.mxu0
  %v157 = vadd.f32 %v53, %v156
  %158 = vmatmul.f32.gmra.mxu0 %v73
  %v159 = vpop.f32.mrf.mxu0
  %v160 = vadd.f32 %v58, %v159
  %161 = vmatmul.f32.gmra.mxu0 %v76
  %v162 = vpop.f32.mrf.mxu0
  %v163 = vadd.f32 %v63, %v162
  %164 = vdwg.mxu0
  %165 = vmatpush.msra.mxu0 0.0
  %166 = vmatpush.msra.mxu0 0.0
  %167 = vmatpush.msra.mxu0 0.0
  %168 = vmatpush.msra.mxu0 0.0
  %169 = vmatpush.msra.mxu0 0.0
  %170 = vmatpush.msra.mxu0 0.0
  %171 = vmatpush.msra.mxu0 0.0
  %172 = vmatpush.msra.mxu0 0.0
  %173 = vmatpush.msra.mxu0 0.0
  %174 = vmatpush.msra.mxu0 0.0
  %175 = vmatpush.msra.mxu0 0.0
  %176 = vmatpush.msra.mxu0 0.0
  %177 = vmatpush.msra.mxu0 0.0
  %178 = vmatpush.msra.mxu0 0.0
  %179 = vmatpush.msra.mxu0 %v40
  %180 = vmatpush.msra.mxu0 %v36
  %181 = vmatmul.f32.gmra.mxu0 %v67
  %v182 = vpop.f32.mrf.mxu0
  %v183 = vadd.f32 %v48, %v182
  %184 = vmatmul.f32.gmra.mxu0 %v70
  %v185 = vpop.f32.mrf.mxu0
  %v186 = vadd.f32 %v53, %v185
  %187 = vmatmul.f32.gmra.mxu0 %v73
  %v188 = vpop.f32.mrf.mxu0
  %v189 = vadd.f32 %v58, %v188
  %190 = vmatmul.f32.gmra.mxu0 %v76
  %v191 = vpop.f32.mrf.mxu0
  %v192 = vadd.f32 %v63, %v191
  %193 = vdwg.mxu0
  %v194 = vmax.f32 %v96, 0.0
  %v195 = vmax.f32 %v125, 0.0
  %v196 = vmax.f32 %v154, 0.0
  %v197 = vmax.f32 %v183, 0.0
  %v198 = vmax.f32 %v99, 0.0
  %v199 = vmax.f32 %v128, 0.0
  %v200 = vmax.f32 %v157, 0.0
  %v201 = vmax.f32 %v186, 0.0
  %v202 = vmax.f32 %v102, 0.0
  %v203 = vmax.f32 %v131, 0.0
  %v204 = vmax.f32 %v160, 0.0
  %v205 = vmax.f32 %v189, 0.0
  %v206 = vmax.f32 %v105, 0.0
  %v207 = vmax.f32 %v134, 0.0
  %v208 = vmax.f32 %v163, 0.0
  %v209 = vmax.f32 %v192, 0.0
  %v210 = vld [vmem:[%s3] sm:$0xff]
  %v211 = vld [vmem:[%s3 + $0x8] sm:$0xff]
  %v212 = vld [vmem:[%s3 + $0x10] sm:$0xff]
  %v213 = vld [vmem:[%s3 + $0x18] sm:$0xff]
  %v214 = vld [vmem:[%s4] sm:$0xff]
  %v215 = vld [vmem:[%s4 + $0x8] sm:$0xff]
  %v216 = vld [vmem:[%s4 + $0x10] sm:$0xff]
  %v217 = vld [vmem:[%s4 + $0x18] sm:$0xff]
  %219 = vset.pattern.permute.xlu0 0
  %220 = vperm.xlu0 %219, %v214
  %v221 = vpop.permute.xlu0 %220
  %224 = vset.pattern.permute.xlu0 0
  %225 = vperm.xlu0 %224, %v215
  %v226 = vpop.permute.xlu0 %225
  %229 = vset.pattern.permute.xlu0 0
  %230 = vperm.xlu0 %229, %v216
  %v231 = vpop.permute.xlu0 %230
  %234 = vset.pattern.permute.xlu0 0
  %235 = vperm.xlu0 %234, %v217
  %v236 = vpop.permute.xlu0 %235
  %vm238 = vcmask 261120
  %v240 = vsel %vm238, %v210, 0
  %v243 = vsel %vm238, %v211, 0
  %v246 = vsel %vm238, %v212, 0
  %v249 = vsel %vm238, %v213, 0
  %251 = vmatpush.msra.mxu0 0.0
  %252 = vmatpush.msra.mxu0 0.0
  %253 = vmatpush.msra.mxu0 0.0
  %254 = vmatpush.msra.mxu0 0.0
  %255 = vmatpush.msra.mxu0 0.0
  %256 = vmatpush.msra.mxu0 0.0
  %257 = vmatpush.msra.mxu0 0.0
  %258 = vmatpush.msra.mxu0 0.0
  %259 = vmatpush.msra.mxu0 0.0
  %260 = vmatpush.msra.mxu0 0.0
  %261 = vmatpush.msra.mxu0 0.0
  %262 = vmatpush.msra.mxu0 0.0
  %263 = vmatpush.msra.mxu0 %v206
  %264 = vmatpush.msra.mxu0 %v202
  %265 = vmatpush.msra.mxu0 %v198
  %266 = vmatpush.msra.mxu0 %v194
  %267 = vmatmul.f32.gmra.mxu0 %v240
  %v268 = vpop.f32.mrf.mxu0
  %v269 = vadd.f32 %v221, %v268
  %270 = vmatmul.f32.gmra.mxu0 %v243
  %v271 = vpop.f32.mrf.mxu0
  %v272 = vadd.f32 %v226, %v271
  %273 = vmatmul.f32.gmra.mxu0 %v246
  %v274 = vpop.f32.mrf.mxu0
  %v275 = vadd.f32 %v231, %v274
  %276 = vmatmul.f32.gmra.mxu0 %v249
  %v277 = vpop.f32.mrf.mxu0
  %v278 = vadd.f32 %v236, %v277
  %279 = vdwg.mxu0
  %280 = vmatpush.msra.mxu0 0.0
  %281 = vmatpush.msra.mxu0 0.0
  %282 = vmatpush.msra.mxu0 0.0
  %283 = vmatpush.msra.mxu0 0.0
  %284 = vmatpush.msra.mxu0 0.0
  %285 = vmatpush.msra.mxu0 0.0
  %286 = vmatpush.msra.mxu0 0.0
  %287 = vmatpush.msra.mxu0 0.0
  %288 = vmatpush.msra.mxu0 0.0
  %289 = vmatpush.msra.mxu0 0.0
  %290 = vmatpush.msra.mxu0 0.0
  %291 = vmatpush.msra.mxu0 0.0
  %292 = vmatpush.msra.mxu0 %v207
  %293 = vmatpush.msra.mxu0 %v203
  %294 = vmatpush.msra.mxu0 %v199
  %295 = vmatpush.msra.mxu0 %v195
  %296 = vmatmul.f32.gmra.mxu0 %v240
  %v297 = vpop.f32.mrf.mxu0
  %v298 = vadd.f32 %v221, %v297
  %299 = vmatmul.f32.gmra.mxu0 %v243
  %v300 = vpop.f32.mrf.mxu0
  %v301 = vadd.f32 %v226, %v300
  %302 = vmatmul.f32.gmra.mxu0 %v246
  %v303 = vpop.f32.mrf.mxu0
  %v304 = vadd.f32 %v231, %v303
  %305 = vmatmul.f32.gmra.mxu0 %v249
  %v306 = vpop.f32.mrf.mxu0
  %v307 = vadd.f32 %v236, %v306
  %308 = vdwg.mxu0
  %309 = vmatpush.msra.mxu0 0.0
  %310 = vmatpush.msra.mxu0 0.0
  %311 = vmatpush.msra.mxu0 0.0
  %312 = vmatpush.msra.mxu0 0.0
  %313 = vmatpush.msra.mxu0 0.0
  %314 = vmatpush.msra.mxu0 0.0
  %315 = vmatpush.msra.mxu0 0.0
  %316 = vmatpush.msra.mxu0 0.0
  %317 = vmatpush.msra.mxu0 0.0
  %318 = vmatpush.msra.mxu0 0.0
  %319 = vmatpush.msra.mxu0 0.0
  %320 = vmatpush.msra.mxu0 0.0
  %321 = vmatpush.msra.mxu0 %v208
  %322 = vmatpush.msra.mxu0 %v204
  %323 = vmatpush.msra.mxu0 %v200
  %324 = vmatpush.msra.mxu0 %v196
  %325 = vmatmul.f32.gmra.mxu0 %v240
  %v326 = vpop.f32.mrf.mxu0
  %v327 = vadd.f32 %v221, %v326
  %328 = vmatmul.f32.gmra.mxu0 %v243
  %v329 = vpop.f32.mrf.mxu0
  %v330 = vadd.f32 %v226, %v329
  %331 = vmatmul.f32.gmra.mxu0 %v246
  %v332 = vpop.f32.mrf.mxu0
  %v333 = vadd.f32 %v231, %v332
  %334 = vmatmul.f32.gmra.mxu0 %v249
  %v335 = vpop.f32.mrf.mxu0
  %v336 = vadd.f32 %v236, %v335
  %337 = vdwg.mxu0
  %338 = vmatpush.msra.mxu0 0.0
  %339 = vmatpush.msra.mxu0 0.0
  %340 = vmatpush.msra.mxu0 0.0
  %341 = vmatpush.msra.mxu0 0.0
  %342 = vmatpush.msra.mxu0 0.0
  %343 = vmatpush.msra.mxu0 0.0
  %344 = vmatpush.msra.mxu0 0.0
  %345 = vmatpush.msra.mxu0 0.0
  %346 = vmatpush.msra.mxu0 0.0
  %347 = vmatpush.msra.mxu0 0.0
  %348 = vmatpush.msra.mxu0 0.0
  %349 = vmatpush.msra.mxu0 0.0
  %350 = vmatpush.msra.mxu0 %v209
  %351 = vmatpush.msra.mxu0 %v205
  %352 = vmatpush.msra.mxu0 %v201
  %353 = vmatpush.msra.mxu0 %v197
  %354 = vmatmul.f32.gmra.mxu0 %v240
  %v355 = vpop.f32.mrf.mxu0
  %v356 = vadd.f32 %v221, %v355
  %357 = vmatmul.f32.gmra.mxu0 %v243
  %v358 = vpop.f32.mrf.mxu0
  %v359 = vadd.f32 %v226, %v358
  %360 = vmatmul.f32.gmra.mxu0 %v246
  %v361 = vpop.f32.mrf.mxu0
  %v362 = vadd.f32 %v231, %v361
  %363 = vmatmul.f32.gmra.mxu0 %v249
  %v364 = vpop.f32.mrf.mxu0
  %v365 = vadd.f32 %v236, %v364
  %366 = vdwg.mxu0
  %v367 = vld [vmem:[%s5] sm:$0xff]
  %v368 = vld [vmem:[%s5 + $0x8] sm:$0xff]
  %v369 = vld [vmem:[%s5 + $0x10] sm:$0xff]
  %v370 = vld [vmem:[%s5 + $0x18] sm:$0xff]
  %v371 = vld [vmem:[%s5 + $0x20] sm:$0xff]
  %v372 = vld [vmem:[%s5 + $0x28] sm:$0xff]
  %v373 = vld [vmem:[%s5 + $0x30] sm:$0xff]
  %v374 = vld [vmem:[%s5 + $0x38] sm:$0xff]
  %v375 = vld [vmem:[%s5 + $0x40] sm:$0xff]
  %v376 = vld [vmem:[%s5 + $0x48] sm:$0xff]
  %v377 = vld [vmem:[%s5 + $0x50] sm:$0xff]
  %v378 = vld [vmem:[%s5 + $0x58] sm:$0xff]
  %v379 = vld [vmem:[%s5 + $0x60] sm:$0xff]
  %v380 = vld [vmem:[%s5 + $0x68] sm:$0xff]
  %v381 = vld [vmem:[%s5 + $0x70] sm:$0xff]
  %v382 = vld [vmem:[%s5 + $0x78] sm:$0xff]
  %v383 = vld [vmem:[%s6] sm:$0xff]
  %v384 = vld [vmem:[%s6 + $0x8] sm:$0xff]
  %v385 = vld [vmem:[%s6 + $0x10] sm:$0xff]
  %v386 = vld [vmem:[%s6 + $0x18] sm:$0xff]
  %v387 = vld [vmem:[%s7] sm:$0xff]
  %v388 = vld [vmem:[%s7 + $0x8] sm:$0xff]
  %v389 = vld [vmem:[%s7 + $0x10] sm:$0xff]
  %v390 = vld [vmem:[%s7 + $0x18] sm:$0xff]
  %v391 = vld [vmem:[%s7 + $0x20] sm:$0xff]
  %v392 = vld [vmem:[%s7 + $0x28] sm:$0xff]
  %v393 = vld [vmem:[%s7 + $0x30] sm:$0xff]
  %v394 = vld [vmem:[%s7 + $0x38] sm:$0xff]
  %v395 = vld [vmem:[%s7 + $0x40] sm:$0xff]
  %v396 = vld [vmem:[%s7 + $0x48] sm:$0xff]
  %v397 = vld [vmem:[%s7 + $0x50] sm:$0xff]
  %v398 = vld [vmem:[%s7 + $0x58] sm:$0xff]
  %v399 = vld [vmem:[%s7 + $0x60] sm:$0xff]
  %v400 = vld [vmem:[%s7 + $0x68] sm:$0xff]
  %v401 = vld [vmem:[%s7 + $0x70] sm:$0xff]
  %v402 = vld [vmem:[%s7 + $0x78] sm:$0xff]
  %v403 = vlaneseq
  %v404 = vshrl.u32 %v403, 7
  %v405 = vadd.s32 %v404, 8
  %v406 = vadd.s32 %v404, 16
  %v407 = vadd.s32 %v404, 24
  %v408 = vadd.s32 %v404, 32
  %v409 = vadd.s32 %v404, 40
  %v410 = vadd.s32 %v404, 48
  %v411 = vadd.s32 %v404, 56
  %v412 = vadd.s32 %v404, 64
  %v413 = vadd.s32 %v404, 72
  %v414 = vadd.s32 %v404, 80
  %v415 = vadd.s32 %v404, 88
  %v416 = vadd.s32 %v404, 96
  %v417 = vadd.s32 %v404, 104
  %v418 = vadd.s32 %v404, 112
  %v419 = vadd.s32 %v404, 120
  %v421 = vsel %vm238, %v367, 0
  %v424 = vsel %vm238, %v368, 0
  %v427 = vsel %vm238, %v369, 0
  %v430 = vsel %vm238, %v370, 0
  %v433 = vsel %vm238, %v371, 0
  %v436 = vsel %vm238, %v372, 0
  %v439 = vsel %vm238, %v373, 0
  %v442 = vsel %vm238, %v374, 0
  %v445 = vsel %vm238, %v375, 0
  %v448 = vsel %vm238, %v376, 0
  %v451 = vsel %vm238, %v377, 0
  %v454 = vsel %vm238, %v378, 0
  %v457 = vsel %vm238, %v379, 0
  %v460 = vsel %vm238, %v380, 0
  %v463 = vsel %vm238, %v381, 0
  %v466 = vsel %vm238, %v382, 0
  %468 = vmatpush.msra.mxu0 0.0
  %469 = vmatpush.msra.mxu0 0.0
  %470 = vmatpush.msra.mxu0 0.0
  %471 = vmatpush.msra.mxu0 0.0
  %472 = vmatpush.msra.mxu0 0.0
  %473 = vmatpush.msra.mxu0 0.0
  %474 = vmatpush.msra.mxu0 0.0
  %475 = vmatpush.msra.mxu0 0.0
  %476 = vmatpush.msra.mxu0 0.0
  %477 = vmatpush.msra.mxu0 0.0
  %478 = vmatpush.msra.mxu0 0.0
  %479 = vmatpush.msra.mxu0 0.0
  %480 = vmatpush.msra.mxu0 %v278
  %481 = vmatpush.msra.mxu0 %v275
  %482 = vmatpush.msra.mxu0 %v272
  %483 = vmatpush.msra.mxu0 %v269
  %484 = vmatmul.f32.gmra.mxu0 %v421
  %v485 = vpop.f32.mrf.mxu0
  %v486 = vadd.f32 0.0, %v485
  %487 = vmatmul.f32.gmra.mxu0 %v424
  %v488 = vpop.f32.mrf.mxu0
  %v489 = vadd.f32 0.0, %v488
  %490 = vmatmul.f32.gmra.mxu0 %v427
  %v491 = vpop.f32.mrf.mxu0
  %v492 = vadd.f32 0.0, %v491
  %493 = vmatmul.f32.gmra.mxu0 %v430
  %v494 = vpop.f32.mrf.mxu0
  %v495 = vadd.f32 0.0, %v494
  %496 = vmatmul.f32.gmra.mxu0 %v433
  %v497 = vpop.f32.mrf.mxu0
  %v498 = vadd.f32 0.0, %v497
  %499 = vmatmul.f32.gmra.mxu0 %v436
  %v500 = vpop.f32.mrf.mxu0
  %v501 = vadd.f32 0.0, %v500
  %502 = vmatmul.f32.gmra.mxu0 %v439
  %v503 = vpop.f32.mrf.mxu0
  %v504 = vadd.f32 0.0, %v503
  %505 = vmatmul.f32.gmra.mxu0 %v442
  %v506 = vpop.f32.mrf.mxu0
  %v507 = vadd.f32 0.0, %v506
  %508 = vmatmul.f32.gmra.mxu0 %v445
  %v509 = vpop.f32.mrf.mxu0
  %v510 = vadd.f32 0.0, %v509
  %511 = vmatmul.f32.gmra.mxu0 %v448
  %v512 = vpop.f32.mrf.mxu0
  %v513 = vadd.f32 0.0, %v512
  %514 = vmatmul.f32.gmra.mxu0 %v451
  %v515 = vpop.f32.mrf.mxu0
  %v516 = vadd.f32 0.0, %v515
  %517 = vmatmul.f32.gmra.mxu0 %v454
  %v518 = vpop.f32.mrf.mxu0
  %v519 = vadd.f32 0.0, %v518
  %520 = vmatmul.f32.gmra.mxu0 %v457
  %v521 = vpop.f32.mrf.mxu0
  %v522 = vadd.f32 0.0, %v521
  %523 = vmatmul.f32.gmra.mxu0 %v460
  %v524 = vpop.f32.mrf.mxu0
  %v525 = vadd.f32 0.0, %v524
  %526 = vmatmul.f32.gmra.mxu0 %v463
  %v527 = vpop.f32.mrf.mxu0
  %v528 = vadd.f32 0.0, %v527
  %529 = vmatmul.f32.gmra.mxu0 %v466
  %v530 = vpop.f32.mrf.mxu0
  %v531 = vadd.f32 0.0, %v530
  %532 = vdwg.mxu0
  %533 = vmatpush.msra.mxu0 0.0
  %534 = vmatpush.msra.mxu0 0.0
  %535 = vmatpush.msra.mxu0 0.0
  %536 = vmatpush.msra.mxu0 0.0
  %537 = vmatpush.msra.mxu0 0.0
  %538 = vmatpush.msra.mxu0 0.0
  %539 = vmatpush.msra.mxu0 0.0
  %540 = vmatpush.msra.mxu0 0.0
  %541 = vmatpush.msra.mxu0 0.0
  %542 = vmatpush.msra.mxu0 0.0
  %543 = vmatpush.msra.mxu0 0.0
  %544 = vmatpush.msra.mxu0 0.0
  %545 = vmatpush.msra.mxu0 %v307
  %546 = vmatpush.msra.mxu0 %v304
  %547 = vmatpush.msra.mxu0 %v301
  %548 = vmatpush.msra.mxu0 %v298
  %549 = vmatmul.f32.gmra.mxu0 %v421
  %v550 = vpop.f32.mrf.mxu0
  %v551 = vadd.f32 0.0, %v550
  %552 = vmatmul.f32.gmra.mxu0 %v424
  %v553 = vpop.f32.mrf.mxu0
  %v554 = vadd.f32 0.0, %v553
  %555 = vmatmul.f32.gmra.mxu0 %v427
  %v556 = vpop.f32.mrf.mxu0
  %v557 = vadd.f32 0.0, %v556
  %558 = vmatmul.f32.gmra.mxu0 %v430
  %v559 = vpop.f32.mrf.mxu0
  %v560 = vadd.f32 0.0, %v559
  %561 = vmatmul.f32.gmra.mxu0 %v433
  %v562 = vpop.f32.mrf.mxu0
  %v563 = vadd.f32 0.0, %v562
  %564 = vmatmul.f32.gmra.mxu0 %v436
  %v565 = vpop.f32.mrf.mxu0
  %v566 = vadd.f32 0.0, %v565
  %567 = vmatmul.f32.gmra.mxu0 %v439
  %v568 = vpop.f32.mrf.mxu0
  %v569 = vadd.f32 0.0, %v568
  %570 = vmatmul.f32.gmra.mxu0 %v442
  %v571 = vpop.f32.mrf.mxu0
  %v572 = vadd.f32 0.0, %v571
  %573 = vmatmul.f32.gmra.mxu0 %v445
  %v574 = vpop.f32.mrf.mxu0
  %v575 = vadd.f32 0.0, %v574
  %576 = vmatmul.f32.gmra.mxu0 %v448
  %v577 = vpop.f32.mrf.mxu0
  %v578 = vadd.f32 0.0, %v577
  %579 = vmatmul.f32.gmra.mxu0 %v451
  %v580 = vpop.f32.mrf.mxu0
  %v581 = vadd.f32 0.0, %v580
  %582 = vmatmul.f32.gmra.mxu0 %v454
  %v583 = vpop.f32.mrf.mxu0
  %v584 = vadd.f32 0.0, %v583
  %585 = vmatmul.f32.gmra.mxu0 %v457
  %v586 = vpop.f32.mrf.mxu0
  %v587 = vadd.f32 0.0, %v586
  %588 = vmatmul.f32.gmra.mxu0 %v460
  %v589 = vpop.f32.mrf.mxu0
  %v590 = vadd.f32 0.0, %v589
  %591 = vmatmul.f32.gmra.mxu0 %v463
  %v592 = vpop.f32.mrf.mxu0
  %v593 = vadd.f32 0.0, %v592
  %594 = vmatmul.f32.gmra.mxu0 %v466
  %v595 = vpop.f32.mrf.mxu0
  %v596 = vadd.f32 0.0, %v595
  %597 = vdwg.mxu0
  %598 = vmatpush.msra.mxu0 0.0
  %599 = vmatpush.msra.mxu0 0.0
  %600 = vmatpush.msra.mxu0 0.0
  %601 = vmatpush.msra.mxu0 0.0
  %602 = vmatpush.msra.mxu0 0.0
  %603 = vmatpush.msra.mxu0 0.0
  %604 = vmatpush.msra.mxu0 0.0
  %605 = vmatpush.msra.mxu0 0.0
  %606 = vmatpush.msra.mxu0 0.0
  %607 = vmatpush.msra.mxu0 0.0
  %608 = vmatpush.msra.mxu0 0.0
  %609 = vmatpush.msra.mxu0 0.0
  %610 = vmatpush.msra.mxu0 %v336
  %611 = vmatpush.msra.mxu0 %v333
  %612 = vmatpush.msra.mxu0 %v330
  %613 = vmatpush.msra.mxu0 %v327
  %614 = vmatmul.f32.gmra.mxu0 %v421
  %v615 = vpop.f32.mrf.mxu0
  %v616 = vadd.f32 0.0, %v615
  %617 = vmatmul.f32.gmra.mxu0 %v424
  %v618 = vpop.f32.mrf.mxu0
  %v619 = vadd.f32 0.0, %v618
  %620 = vmatmul.f32.gmra.mxu0 %v427
  %v621 = vpop.f32.mrf.mxu0
  %v622 = vadd.f32 0.0, %v621
  %623 = vmatmul.f32.gmra.mxu0 %v430
  %v624 = vpop.f32.mrf.mxu0
  %v625 = vadd.f32 0.0, %v624
  %626 = vmatmul.f32.gmra.mxu0 %v433
  %v627 = vpop.f32.mrf.mxu0
  %v628 = vadd.f32 0.0, %v627
  %629 = vmatmul.f32.gmra.mxu0 %v436
  %v630 = vpop.f32.mrf.mxu0
  %v631 = vadd.f32 0.0, %v630
  %632 = vmatmul.f32.gmra.mxu0 %v439
  %v633 = vpop.f32.mrf.mxu0
  %v634 = vadd.f32 0.0, %v633
  %635 = vmatmul.f32.gmra.mxu0 %v442
  %v636 = vpop.f32.mrf.mxu0
  %v637 = vadd.f32 0.0, %v636
  %638 = vmatmul.f32.gmra.mxu0 %v445
  %v639 = vpop.f32.mrf.mxu0
  %v640 = vadd.f32 0.0, %v639
  %641 = vmatmul.f32.gmra.mxu0 %v448
  %v642 = vpop.f32.mrf.mxu0
  %v643 = vadd.f32 0.0, %v642
  %644 = vmatmul.f32.gmra.mxu0 %v451
  %v645 = vpop.f32.mrf.mxu0
  %v646 = vadd.f32 0.0, %v645
  %647 = vmatmul.f32.gmra.mxu0 %v454
  %v648 = vpop.f32.mrf.mxu0
  %v649 = vadd.f32 0.0, %v648
  %650 = vmatmul.f32.gmra.mxu0 %v457
  %v651 = vpop.f32.mrf.mxu0
  %v652 = vadd.f32 0.0, %v651
  %653 = vmatmul.f32.gmra.mxu0 %v460
  %v654 = vpop.f32.mrf.mxu0
  %v655 = vadd.f32 0.0, %v654
  %656 = vmatmul.f32.gmra.mxu0 %v463
  %v657 = vpop.f32.mrf.mxu0
  %v658 = vadd.f32 0.0, %v657
  %659 = vmatmul.f32.gmra.mxu0 %v466
  %v660 = vpop.f32.mrf.mxu0
  %v661 = vadd.f32 0.0, %v660
  %662 = vdwg.mxu0
  %663 = vmatpush.msra.mxu0 0.0
  %664 = vmatpush.msra.mxu0 0.0
  %665 = vmatpush.msra.mxu0 0.0
  %666 = vmatpush.msra.mxu0 0.0
  %667 = vmatpush.msra.mxu0 0.0
  %668 = vmatpush.msra.mxu0 0.0
  %669 = vmatpush.msra.mxu0 0.0
  %670 = vmatpush.msra.mxu0 0.0
  %671 = vmatpush.msra.mxu0 0.0
  %672 = vmatpush.msra.mxu0 0.0
  %673 = vmatpush.msra.mxu0 0.0
  %674 = vmatpush.msra.mxu0 0.0
  %675 = vmatpush.msra.mxu0 %v365
  %676 = vmatpush.msra.mxu0 %v362
  %677 = vmatpush.msra.mxu0 %v359
  %678 = vmatpush.msra.mxu0 %v356
  %679 = vmatmul.f32.gmra.mxu0 %v421
  %v680 = vpop.f32.mrf.mxu0
  %v681 = vadd.f32 0.0, %v680
  %682 = vmatmul.f32.gmra.mxu0 %v424
  %v683 = vpop.f32.mrf.mxu0
  %v684 = vadd.f32 0.0, %v683
  %685 = vmatmul.f32.gmra.mxu0 %v427
  %v686 = vpop.f32.mrf.mxu0
  %v687 = vadd.f32 0.0, %v686
  %688 = vmatmul.f32.gmra.mxu0 %v430
  %v689 = vpop.f32.mrf.mxu0
  %v690 = vadd.f32 0.0, %v689
  %691 = vmatmul.f32.gmra.mxu0 %v433
  %v692 = vpop.f32.mrf.mxu0
  %v693 = vadd.f32 0.0, %v692
  %694 = vmatmul.f32.gmra.mxu0 %v436
  %v695 = vpop.f32.mrf.mxu0
  %v696 = vadd.f32 0.0, %v695
  %697 = vmatmul.f32.gmra.mxu0 %v439
  %v698 = vpop.f32.mrf.mxu0
  %v699 = vadd.f32 0.0, %v698
  %700 = vmatmul.f32.gmra.mxu0 %v442
  %v701 = vpop.f32.mrf.mxu0
  %v702 = vadd.f32 0.0, %v701
  %703 = vmatmul.f32.gmra.mxu0 %v445
  %v704 = vpop.f32.mrf.mxu0
  %v705 = vadd.f32 0.0, %v704
  %706 = vmatmul.f32.gmra.mxu0 %v448
  %v707 = vpop.f32.mrf.mxu0
  %v708 = vadd.f32 0.0, %v707
  %709 = vmatmul.f32.gmra.mxu0 %v451
  %v710 = vpop.f32.mrf.mxu0
  %v711 = vadd.f32 0.0, %v710
  %712 = vmatmul.f32.gmra.mxu0 %v454
  %v713 = vpop.f32.mrf.mxu0
  %v714 = vadd.f32 0.0, %v713
  %715 = vmatmul.f32.gmra.mxu0 %v457
  %v716 = vpop.f32.mrf.mxu0
  %v717 = vadd.f32 0.0, %v716
  %718 = vmatmul.f32.gmra.mxu0 %v460
  %v719 = vpop.f32.mrf.mxu0
  %v720 = vadd.f32 0.0, %v719
  %721 = vmatmul.f32.gmra.mxu0 %v463
  %v722 = vpop.f32.mrf.mxu0
  %v723 = vadd.f32 0.0, %v722
  %724 = vmatmul.f32.gmra.mxu0 %v466
  %v725 = vpop.f32.mrf.mxu0
  %v726 = vadd.f32 0.0, %v725
  %727 = vdwg.mxu0
  %729 = vset.pattern.permute.xlu0 0
  %730 = vperm.xlu0 %729, %v387
  %v731 = vpop.permute.xlu0 %730
  %734 = vset.pattern.permute.xlu0 0
  %735 = vperm.xlu0 %734, %v388
  %v736 = vpop.permute.xlu0 %735
  %739 = vset.pattern.permute.xlu0 0
  %740 = vperm.xlu0 %739, %v389
  %v741 = vpop.permute.xlu0 %740
  %744 = vset.pattern.permute.xlu0 0
  %745 = vperm.xlu0 %744, %v390
  %v746 = vpop.permute.xlu0 %745
  %749 = vset.pattern.permute.xlu0 0
  %750 = vperm.xlu0 %749, %v391
  %v751 = vpop.permute.xlu0 %750
  %754 = vset.pattern.permute.xlu0 0
  %755 = vperm.xlu0 %754, %v392
  %v756 = vpop.permute.xlu0 %755
  %759 = vset.pattern.permute.xlu0 0
  %760 = vperm.xlu0 %759, %v393
  %v761 = vpop.permute.xlu0 %760
  %764 = vset.pattern.permute.xlu0 0
  %765 = vperm.xlu0 %764, %v394
  %v766 = vpop.permute.xlu0 %765
  %769 = vset.pattern.permute.xlu0 0
  %770 = vperm.xlu0 %769, %v395
  %v771 = vpop.permute.xlu0 %770
  %774 = vset.pattern.permute.xlu0 0
  %775 = vperm.xlu0 %774, %v396
  %v776 = vpop.permute.xlu0 %775
  %779 = vset.pattern.permute.xlu0 0
  %780 = vperm.xlu0 %779, %v397
  %v781 = vpop.permute.xlu0 %780
  %784 = vset.pattern.permute.xlu0 0
  %785 = vperm.xlu0 %784, %v398
  %v786 = vpop.permute.xlu0 %785
  %789 = vset.pattern.permute.xlu0 0
  %790 = vperm.xlu0 %789, %v399
  %v791 = vpop.permute.xlu0 %790
  %794 = vset.pattern.permute.xlu0 0
  %795 = vperm.xlu0 %794, %v400
  %v796 = vpop.permute.xlu0 %795
  %799 = vset.pattern.permute.xlu0 0
  %800 = vperm.xlu0 %799, %v401
  %v801 = vpop.permute.xlu0 %800
  %804 = vset.pattern.permute.xlu0 0
  %805 = vperm.xlu0 %804, %v402
  %v806 = vpop.permute.xlu0 %805
  %v808 = vadd.f32 %v731, %v486
  %v809 = vadd.f32 %v731, %v551
  %v810 = vadd.f32 %v731, %v616
  %v811 = vadd.f32 %v731, %v681
  %v812 = vadd.f32 %v736, %v489
  %v813 = vadd.f32 %v736, %v554
  %v814 = vadd.f32 %v736, %v619
  %v815 = vadd.f32 %v736, %v684
  %v816 = vadd.f32 %v741, %v492
  %v817 = vadd.f32 %v741, %v557
  %v818 = vadd.f32 %v741, %v622
  %v819 = vadd.f32 %v741, %v687
  %v820 = vadd.f32 %v746, %v495
  %v821 = vadd.f32 %v746, %v560
  %v822 = vadd.f32 %v746, %v625
  %v823 = vadd.f32 %v746, %v690
  %v824 = vadd.f32 %v751, %v498
  %v825 = vadd.f32 %v751, %v563
  %v826 = vadd.f32 %v751, %v628
  %v827 = vadd.f32 %v751, %v693
  %v828 = vadd.f32 %v756, %v501
  %v829 = vadd.f32 %v756, %v566
  %v830 = vadd.f32 %v756, %v631
  %v831 = vadd.f32 %v756, %v696
  %v832 = vadd.f32 %v761, %v504
  %v833 = vadd.f32 %v761, %v569
  %v834 = vadd.f32 %v761, %v634
  %v835 = vadd.f32 %v761, %v699
  %v836 = vadd.f32 %v766, %v507
  %v837 = vadd.f32 %v766, %v572
  %v838 = vadd.f32 %v766, %v637
  %v839 = vadd.f32 %v766, %v702
  %v840 = vadd.f32 %v771, %v510
  %v841 = vadd.f32 %v771, %v575
  %v842 = vadd.f32 %v771, %v640
  %v843 = vadd.f32 %v771, %v705
  %v844 = vadd.f32 %v776, %v513
  %v845 = vadd.f32 %v776, %v578
  %v846 = vadd.f32 %v776, %v643
  %v847 = vadd.f32 %v776, %v708
  %v848 = vadd.f32 %v781, %v516
  %v849 = vadd.f32 %v781, %v581
  %v850 = vadd.f32 %v781, %v646
  %v851 = vadd.f32 %v781, %v711
  %v852 = vadd.f32 %v786, %v519
  %v853 = vadd.f32 %v786, %v584
  %v854 = vadd.f32 %v786, %v649
  %v855 = vadd.f32 %v786, %v714
  %v856 = vadd.f32 %v791, %v522
  %v857 = vadd.f32 %v791, %v587
  %v858 = vadd.f32 %v791, %v652
  %v859 = vadd.f32 %v791, %v717
  %v860 = vadd.f32 %v796, %v525
  %v861 = vadd.f32 %v796, %v590
  %v862 = vadd.f32 %v796, %v655
  %v863 = vadd.f32 %v796, %v720
  %v864 = vadd.f32 %v801, %v528
  %v865 = vadd.f32 %v801, %v593
  %v866 = vadd.f32 %v801, %v658
  %v867 = vadd.f32 %v801, %v723
  %v868 = vadd.f32 %v806, %v531
  %v869 = vadd.f32 %v806, %v596
  %v870 = vadd.f32 %v806, %v661
  %v871 = vadd.f32 %v806, %v726
  %v872 = vmin.f32 %v808, %v812
  %v873 = vmin.f32 %v872, %v816
  %v874 = vmin.f32 %v873, %v820
  %v875 = vmin.f32 %v874, %v824
  %v876 = vmin.f32 %v875, %v828
  %v877 = vmin.f32 %v876, %v832
  %v878 = vmin.f32 %v877, %v836
  %v879 = vmin.f32 %v878, %v840
  %v880 = vmin.f32 %v879, %v844
  %v881 = vmin.f32 %v880, %v848
  %v882 = vmin.f32 %v881, %v852
  %v883 = vmin.f32 %v882, %v856
  %v884 = vmin.f32 %v883, %v860
  %v885 = vmin.f32 %v884, %v864
  %v886 = vmin.f32 %v885, %v868
  %v887 = vrot.slane %v886, 4
  %v888 = vmin.f32 %v886, %v887
  %v889 = vrot.slane %v888, 2
  %v890 = vmin.f32 %v888, %v889
  %v891 = vrot.slane %v890, 1
  %v892 = vmin.f32 %v890, %v891
  %v893 = vmin.f32 %v809, %v813
  %v894 = vmin.f32 %v893, %v817
  %v895 = vmin.f32 %v894, %v821
  %v896 = vmin.f32 %v895, %v825
  %v897 = vmin.f32 %v896, %v829
  %v898 = vmin.f32 %v897, %v833
  %v899 = vmin.f32 %v898, %v837
  %v900 = vmin.f32 %v899, %v841
  %v901 = vmin.f32 %v900, %v845
  %v902 = vmin.f32 %v901, %v849
  %v903 = vmin.f32 %v902, %v853
  %v904 = vmin.f32 %v903, %v857
  %v905 = vmin.f32 %v904, %v861
  %v906 = vmin.f32 %v905, %v865
  %v907 = vmin.f32 %v906, %v869
  %v908 = vrot.slane %v907, 4
  %v909 = vmin.f32 %v907, %v908
  %v910 = vrot.slane %v909, 2
  %v911 = vmin.f32 %v909, %v910
  %v912 = vrot.slane %v911, 1
  %v913 = vmin.f32 %v911, %v912
  %v914 = vmin.f32 %v810, %v814
  %v915 = vmin.f32 %v914, %v818
  %v916 = vmin.f32 %v915, %v822
  %v917 = vmin.f32 %v916, %v826
  %v918 = vmin.f32 %v917, %v830
  %v919 = vmin.f32 %v918, %v834
  %v920 = vmin.f32 %v919, %v838
  %v921 = vmin.f32 %v920, %v842
  %v922 = vmin.f32 %v921, %v846
  %v923 = vmin.f32 %v922, %v850
  %v924 = vmin.f32 %v923, %v854
  %v925 = vmin.f32 %v924, %v858
  %v926 = vmin.f32 %v925, %v862
  %v927 = vmin.f32 %v926, %v866
  %v928 = vmin.f32 %v927, %v870
  %v929 = vrot.slane %v928, 4
  %v930 = vmin.f32 %v928, %v929
  %v931 = vrot.slane %v930, 2
  %v932 = vmin.f32 %v930, %v931
  %v933 = vrot.slane %v932, 1
  %v934 = vmin.f32 %v932, %v933
  %v935 = vmin.f32 %v811, %v815
  %v936 = vmin.f32 %v935, %v819
  %v937 = vmin.f32 %v936, %v823
  %v938 = vmin.f32 %v937, %v827
  %v939 = vmin.f32 %v938, %v831
  %v940 = vmin.f32 %v939, %v835
  %v941 = vmin.f32 %v940, %v839
  %v942 = vmin.f32 %v941, %v843
  %v943 = vmin.f32 %v942, %v847
  %v944 = vmin.f32 %v943, %v851
  %v945 = vmin.f32 %v944, %v855
  %v946 = vmin.f32 %v945, %v859
  %v947 = vmin.f32 %v946, %v863
  %v948 = vmin.f32 %v947, %v867
  %v949 = vmin.f32 %v948, %v871
  %v950 = vrot.slane %v949, 4
  %v951 = vmin.f32 %v949, %v950
  %v952 = vrot.slane %v951, 2
  %v953 = vmin.f32 %v951, %v952
  %v954 = vrot.slane %v953, 1
  %v955 = vmin.f32 %v953, %v954
  %vm956 = vcmp.le.f32.partialorder %v808, %v892
  %vm957 = vcmp.le.f32.partialorder %v809, %v913
  %vm958 = vcmp.le.f32.partialorder %v810, %v934
  %vm959 = vcmp.le.f32.partialorder %v811, %v955
  %vm960 = vcmp.le.f32.partialorder %v812, %v892
  %vm961 = vcmp.le.f32.partialorder %v813, %v913
  %vm962 = vcmp.le.f32.partialorder %v814, %v934
  %vm963 = vcmp.le.f32.partialorder %v815, %v955
  %vm964 = vcmp.le.f32.partialorder %v816, %v892
  %vm965 = vcmp.le.f32.partialorder %v817, %v913
  %vm966 = vcmp.le.f32.partialorder %v818, %v934
  %vm967 = vcmp.le.f32.partialorder %v819, %v955
  %vm968 = vcmp.le.f32.partialorder %v820, %v892
  %vm969 = vcmp.le.f32.partialorder %v821, %v913
  %vm970 = vcmp.le.f32.partialorder %v822, %v934
  %vm971 = vcmp.le.f32.partialorder %v823, %v955
  %vm972 = vcmp.le.f32.partialorder %v824, %v892
  %vm973 = vcmp.le.f32.partialorder %v825, %v913
  %vm974 = vcmp.le.f32.partialorder %v826, %v934
  %vm975 = vcmp.le.f32.partialorder %v827, %v955
  %vm976 = vcmp.le.f32.partialorder %v828, %v892
  %vm977 = vcmp.le.f32.partialorder %v829, %v913
  %vm978 = vcmp.le.f32.partialorder %v830, %v934
  %vm979 = vcmp.le.f32.partialorder %v831, %v955
  %vm980 = vcmp.le.f32.partialorder %v832, %v892
  %vm981 = vcmp.le.f32.partialorder %v833, %v913
  %vm982 = vcmp.le.f32.partialorder %v834, %v934
  %vm983 = vcmp.le.f32.partialorder %v835, %v955
  %vm984 = vcmp.le.f32.partialorder %v836, %v892
  %vm985 = vcmp.le.f32.partialorder %v837, %v913
  %vm986 = vcmp.le.f32.partialorder %v838, %v934
  %vm987 = vcmp.le.f32.partialorder %v839, %v955
  %vm988 = vcmp.le.f32.partialorder %v840, %v892
  %vm989 = vcmp.le.f32.partialorder %v841, %v913
  %vm990 = vcmp.le.f32.partialorder %v842, %v934
  %vm991 = vcmp.le.f32.partialorder %v843, %v955
  %vm992 = vcmp.le.f32.partialorder %v844, %v892
  %vm993 = vcmp.le.f32.partialorder %v845, %v913
  %vm994 = vcmp.le.f32.partialorder %v846, %v934
  %vm995 = vcmp.le.f32.partialorder %v847, %v955
  %vm996 = vcmp.le.f32.partialorder %v848, %v892
  %vm997 = vcmp.le.f32.partialorder %v849, %v913
  %vm998 = vcmp.le.f32.partialorder %v850, %v934
  %vm999 = vcmp.le.f32.partialorder %v851, %v955
  %vm1000 = vcmp.le.f32.partialorder %v852, %v892
  %vm1001 = vcmp.le.f32.partialorder %v853, %v913
  %vm1002 = vcmp.le.f32.partialorder %v854, %v934
  %vm1003 = vcmp.le.f32.partialorder %v855, %v955
  %vm1004 = vcmp.le.f32.partialorder %v856, %v892
  %vm1005 = vcmp.le.f32.partialorder %v857, %v913
  %vm1006 = vcmp.le.f32.partialorder %v858, %v934
  %vm1007 = vcmp.le.f32.partialorder %v859, %v955
  %vm1008 = vcmp.le.f32.partialorder %v860, %v892
  %vm1009 = vcmp.le.f32.partialorder %v861, %v913
  %vm1010 = vcmp.le.f32.partialorder %v862, %v934
  %vm1011 = vcmp.le.f32.partialorder %v863, %v955
  %vm1012 = vcmp.le.f32.partialorder %v864, %v892
  %vm1013 = vcmp.le.f32.partialorder %v865, %v913
  %vm1014 = vcmp.le.f32.partialorder %v866, %v934
  %vm1015 = vcmp.le.f32.partialorder %v867, %v955
  %vm1016 = vcmp.le.f32.partialorder %v868, %v892
  %vm1017 = vcmp.le.f32.partialorder %v869, %v913
  %vm1018 = vcmp.le.f32.partialorder %v870, %v934
  %vm1019 = vcmp.le.f32.partialorder %v871, %v955
  %v1020 = vsel %vm956, %v404, 128
  %v1021 = vsel %vm957, %v404, 128
  %v1022 = vsel %vm958, %v404, 128
  %v1023 = vsel %vm959, %v404, 128
  %v1024 = vsel %vm960, %v405, 128
  %v1025 = vsel %vm961, %v405, 128
  %v1026 = vsel %vm962, %v405, 128
  %v1027 = vsel %vm963, %v405, 128
  %v1028 = vsel %vm964, %v406, 128
  %v1029 = vsel %vm965, %v406, 128
  %v1030 = vsel %vm966, %v406, 128
  %v1031 = vsel %vm967, %v406, 128
  %v1032 = vsel %vm968, %v407, 128
  %v1033 = vsel %vm969, %v407, 128
  %v1034 = vsel %vm970, %v407, 128
  %v1035 = vsel %vm971, %v407, 128
  %v1036 = vsel %vm972, %v408, 128
  %v1037 = vsel %vm973, %v408, 128
  %v1038 = vsel %vm974, %v408, 128
  %v1039 = vsel %vm975, %v408, 128
  %v1040 = vsel %vm976, %v409, 128
  %v1041 = vsel %vm977, %v409, 128
  %v1042 = vsel %vm978, %v409, 128
  %v1043 = vsel %vm979, %v409, 128
  %v1044 = vsel %vm980, %v410, 128
  %v1045 = vsel %vm981, %v410, 128
  %v1046 = vsel %vm982, %v410, 128
  %v1047 = vsel %vm983, %v410, 128
  %v1048 = vsel %vm984, %v411, 128
  %v1049 = vsel %vm985, %v411, 128
  %v1050 = vsel %vm986, %v411, 128
  %v1051 = vsel %vm987, %v411, 128
  %v1052 = vsel %vm988, %v412, 128
  %v1053 = vsel %vm989, %v412, 128
  %v1054 = vsel %vm990, %v412, 128
  %v1055 = vsel %vm991, %v412, 128
  %v1056 = vsel %vm992, %v413, 128
  %v1057 = vsel %vm993, %v413, 128
  %v1058 = vsel %vm994, %v413, 128
  %v1059 = vsel %vm995, %v413, 128
  %v1060 = vsel %vm996, %v414, 128
  %v1061 = vsel %vm997, %v414, 128
  %v1062 = vsel %vm998, %v414, 128
  %v1063 = vsel %vm999, %v414, 128
  %v1064 = vsel %vm1000, %v415, 128
  %v1065 = vsel %vm1001, %v415, 128
  %v1066 = vsel %vm1002, %v415, 128
  %v1067 = vsel %vm1003, %v415, 128
  %v1068 = vsel %vm1004, %v416, 128
  %v1069 = vsel %vm1005, %v416, 128
  %v1070 = vsel %vm1006, %v416, 128
  %v1071 = vsel %vm1007, %v416, 128
  %v1072 = vsel %vm1008, %v417, 128
  %v1073 = vsel %vm1009, %v417, 128
  %v1074 = vsel %vm1010, %v417, 128
  %v1075 = vsel %vm1011, %v417, 128
  %v1076 = vsel %vm1012, %v418, 128
  %v1077 = vsel %vm1013, %v418, 128
  %v1078 = vsel %vm1014, %v418, 128
  %v1079 = vsel %vm1015, %v418, 128
  %v1080 = vsel %vm1016, %v419, 128
  %v1081 = vsel %vm1017, %v419, 128
  %v1082 = vsel %vm1018, %v419, 128
  %v1083 = vsel %vm1019, %v419, 128
  %vm1084 = vcmp.lt.s32.totalorder %v1020, %v1024
  %v1085 = vsel %vm1084, %v1020, %v1024
  %vm1086 = vcmp.lt.s32.totalorder %v1085, %v1028
  %v1087 = vsel %vm1086, %v1085, %v1028
  %vm1088 = vcmp.lt.s32.totalorder %v1087, %v1032
  %v1089 = vsel %vm1088, %v1087, %v1032
  %vm1090 = vcmp.lt.s32.totalorder %v1089, %v1036
  %v1091 = vsel %vm1090, %v1089, %v1036
  %vm1092 = vcmp.lt.s32.totalorder %v1091, %v1040
  %v1093 = vsel %vm1092, %v1091, %v1040
  %vm1094 = vcmp.lt.s32.totalorder %v1093, %v1044
  %v1095 = vsel %vm1094, %v1093, %v1044
  %vm1096 = vcmp.lt.s32.totalorder %v1095, %v1048
  %v1097 = vsel %vm1096, %v1095, %v1048
  %vm1098 = vcmp.lt.s32.totalorder %v1097, %v1052
  %v1099 = vsel %vm1098, %v1097, %v1052
  %vm1100 = vcmp.lt.s32.totalorder %v1099, %v1056
  %v1101 = vsel %vm1100, %v1099, %v1056
  %vm1102 = vcmp.lt.s32.totalorder %v1101, %v1060
  %v1103 = vsel %vm1102, %v1101, %v1060
  %vm1104 = vcmp.lt.s32.totalorder %v1103, %v1064
  %v1105 = vsel %vm1104, %v1103, %v1064
  %vm1106 = vcmp.lt.s32.totalorder %v1105, %v1068
  %v1107 = vsel %vm1106, %v1105, %v1068
  %vm1108 = vcmp.lt.s32.totalorder %v1107, %v1072
  %v1109 = vsel %vm1108, %v1107, %v1072
  %vm1110 = vcmp.lt.s32.totalorder %v1109, %v1076
  %v1111 = vsel %vm1110, %v1109, %v1076
  %vm1112 = vcmp.lt.s32.totalorder %v1111, %v1080
  %v1113 = vsel %vm1112, %v1111, %v1080
  %v1114 = vrot.slane %v1113, 4
  %vm1115 = vcmp.lt.s32.totalorder %v1113, %v1114
  %v1116 = vsel %vm1115, %v1113, %v1114
  %v1117 = vrot.slane %v1116, 2
  %vm1118 = vcmp.lt.s32.totalorder %v1116, %v1117
  %v1119 = vsel %vm1118, %v1116, %v1117
  %v1120 = vrot.slane %v1119, 1
  %vm1121 = vcmp.lt.s32.totalorder %v1119, %v1120
  %v1122 = vsel %vm1121, %v1119, %v1120
  %vm1123 = vcmp.lt.s32.totalorder %v1021, %v1025
  %v1124 = vsel %vm1123, %v1021, %v1025
  %vm1125 = vcmp.lt.s32.totalorder %v1124, %v1029
  %v1126 = vsel %vm1125, %v1124, %v1029
  %vm1127 = vcmp.lt.s32.totalorder %v1126, %v1033
  %v1128 = vsel %vm1127, %v1126, %v1033
  %vm1129 = vcmp.lt.s32.totalorder %v1128, %v1037
  %v1130 = vsel %vm1129, %v1128, %v1037
  %vm1131 = vcmp.lt.s32.totalorder %v1130, %v1041
  %v1132 = vsel %vm1131, %v1130, %v1041
  %vm1133 = vcmp.lt.s32.totalorder %v1132, %v1045
  %v1134 = vsel %vm1133, %v1132, %v1045
  %vm1135 = vcmp.lt.s32.totalorder %v1134, %v1049
  %v1136 = vsel %vm1135, %v1134, %v1049
  %vm1137 = vcmp.lt.s32.totalorder %v1136, %v1053
  %v1138 = vsel %vm1137, %v1136, %v1053
  %vm1139 = vcmp.lt.s32.totalorder %v1138, %v1057
  %v1140 = vsel %vm1139, %v1138, %v1057
  %vm1141 = vcmp.lt.s32.totalorder %v1140, %v1061
  %v1142 = vsel %vm1141, %v1140, %v1061
  %vm1143 = vcmp.lt.s32.totalorder %v1142, %v1065
  %v1144 = vsel %vm1143, %v1142, %v1065
  %vm1145 = vcmp.lt.s32.totalorder %v1144, %v1069
  %v1146 = vsel %vm1145, %v1144, %v1069
  %vm1147 = vcmp.lt.s32.totalorder %v1146, %v1073
  %v1148 = vsel %vm1147, %v1146, %v1073
  %vm1149 = vcmp.lt.s32.totalorder %v1148, %v1077
  %v1150 = vsel %vm1149, %v1148, %v1077
  %vm1151 = vcmp.lt.s32.totalorder %v1150, %v1081
  %v1152 = vsel %vm1151, %v1150, %v1081
  %v1153 = vrot.slane %v1152, 4
  %vm1154 = vcmp.lt.s32.totalorder %v1152, %v1153
  %v1155 = vsel %vm1154, %v1152, %v1153
  %v1156 = vrot.slane %v1155, 2
  %vm1157 = vcmp.lt.s32.totalorder %v1155, %v1156
  %v1158 = vsel %vm1157, %v1155, %v1156
  %v1159 = vrot.slane %v1158, 1
  %vm1160 = vcmp.lt.s32.totalorder %v1158, %v1159
  %v1161 = vsel %vm1160, %v1158, %v1159
  %vm1162 = vcmp.lt.s32.totalorder %v1022, %v1026
  %v1163 = vsel %vm1162, %v1022, %v1026
  %vm1164 = vcmp.lt.s32.totalorder %v1163, %v1030
  %v1165 = vsel %vm1164, %v1163, %v1030
  %vm1166 = vcmp.lt.s32.totalorder %v1165, %v1034
  %v1167 = vsel %vm1166, %v1165, %v1034
  %vm1168 = vcmp.lt.s32.totalorder %v1167, %v1038
  %v1169 = vsel %vm1168, %v1167, %v1038
  %vm1170 = vcmp.lt.s32.totalorder %v1169, %v1042
  %v1171 = vsel %vm1170, %v1169, %v1042
  %vm1172 = vcmp.lt.s32.totalorder %v1171, %v1046
  %v1173 = vsel %vm1172, %v1171, %v1046
  %vm1174 = vcmp.lt.s32.totalorder %v1173, %v1050
  %v1175 = vsel %vm1174, %v1173, %v1050
  %vm1176 = vcmp.lt.s32.totalorder %v1175, %v1054
  %v1177 = vsel %vm1176, %v1175, %v1054
  %vm1178 = vcmp.lt.s32.totalorder %v1177, %v1058
  %v1179 = vsel %vm1178, %v1177, %v1058
  %vm1180 = vcmp.lt.s32.totalorder %v1179, %v1062
  %v1181 = vsel %vm1180, %v1179, %v1062
  %vm1182 = vcmp.lt.s32.totalorder %v1181, %v1066
  %v1183 = vsel %vm1182, %v1181, %v1066
  %vm1184 = vcmp.lt.s32.totalorder %v1183, %v1070
  %v1185 = vsel %vm1184, %v1183, %v1070
  %vm1186 = vcmp.lt.s32.totalorder %v1185, %v1074
  %v1187 = vsel %vm1186, %v1185, %v1074
  %vm1188 = vcmp.lt.s32.totalorder %v1187, %v1078
  %v1189 = vsel %vm1188, %v1187, %v1078
  %vm1190 = vcmp.lt.s32.totalorder %v1189, %v1082
  %v1191 = vsel %vm1190, %v1189, %v1082
  %v1192 = vrot.slane %v1191, 4
  %vm1193 = vcmp.lt.s32.totalorder %v1191, %v1192
  %v1194 = vsel %vm1193, %v1191, %v1192
  %v1195 = vrot.slane %v1194, 2
  %vm1196 = vcmp.lt.s32.totalorder %v1194, %v1195
  %v1197 = vsel %vm1196, %v1194, %v1195
  %v1198 = vrot.slane %v1197, 1
  %vm1199 = vcmp.lt.s32.totalorder %v1197, %v1198
  %v1200 = vsel %vm1199, %v1197, %v1198
  %vm1201 = vcmp.lt.s32.totalorder %v1023, %v1027
  %v1202 = vsel %vm1201, %v1023, %v1027
  %vm1203 = vcmp.lt.s32.totalorder %v1202, %v1031
  %v1204 = vsel %vm1203, %v1202, %v1031
  %vm1205 = vcmp.lt.s32.totalorder %v1204, %v1035
  %v1206 = vsel %vm1205, %v1204, %v1035
  %vm1207 = vcmp.lt.s32.totalorder %v1206, %v1039
  %v1208 = vsel %vm1207, %v1206, %v1039
  %vm1209 = vcmp.lt.s32.totalorder %v1208, %v1043
  %v1210 = vsel %vm1209, %v1208, %v1043
  %vm1211 = vcmp.lt.s32.totalorder %v1210, %v1047
  %v1212 = vsel %vm1211, %v1210, %v1047
  %vm1213 = vcmp.lt.s32.totalorder %v1212, %v1051
  %v1214 = vsel %vm1213, %v1212, %v1051
  %vm1215 = vcmp.lt.s32.totalorder %v1214, %v1055
  %v1216 = vsel %vm1215, %v1214, %v1055
  %vm1217 = vcmp.lt.s32.totalorder %v1216, %v1059
  %v1218 = vsel %vm1217, %v1216, %v1059
  %vm1219 = vcmp.lt.s32.totalorder %v1218, %v1063
  %v1220 = vsel %vm1219, %v1218, %v1063
  %vm1221 = vcmp.lt.s32.totalorder %v1220, %v1067
  %v1222 = vsel %vm1221, %v1220, %v1067
  %vm1223 = vcmp.lt.s32.totalorder %v1222, %v1071
  %v1224 = vsel %vm1223, %v1222, %v1071
  %vm1225 = vcmp.lt.s32.totalorder %v1224, %v1075
  %v1226 = vsel %vm1225, %v1224, %v1075
  %vm1227 = vcmp.lt.s32.totalorder %v1226, %v1079
  %v1228 = vsel %vm1227, %v1226, %v1079
  %vm1229 = vcmp.lt.s32.totalorder %v1228, %v1083
  %v1230 = vsel %vm1229, %v1228, %v1083
  %v1231 = vrot.slane %v1230, 4
  %vm1232 = vcmp.lt.s32.totalorder %v1230, %v1231
  %v1233 = vsel %vm1232, %v1230, %v1231
  %v1234 = vrot.slane %v1233, 2
  %vm1235 = vcmp.lt.s32.totalorder %v1233, %v1234
  %v1236 = vsel %vm1235, %v1233, %v1234
  %v1237 = vrot.slane %v1236, 1
  %vm1238 = vcmp.lt.s32.totalorder %v1236, %v1237
  %v1239 = vsel %vm1238, %v1236, %v1237
  %vm1240 = vcmp.eq.s32.totalorder %v404, %v1122
  %vm1241 = vcmp.eq.s32.totalorder %v404, %v1161
  %vm1242 = vcmp.eq.s32.totalorder %v404, %v1200
  %vm1243 = vcmp.eq.s32.totalorder %v404, %v1239
  %vm1244 = vcmp.eq.s32.totalorder %v405, %v1122
  %vm1245 = vcmp.eq.s32.totalorder %v405, %v1161
  %vm1246 = vcmp.eq.s32.totalorder %v405, %v1200
  %vm1247 = vcmp.eq.s32.totalorder %v405, %v1239
  %vm1248 = vcmp.eq.s32.totalorder %v406, %v1122
  %vm1249 = vcmp.eq.s32.totalorder %v406, %v1161
  %vm1250 = vcmp.eq.s32.totalorder %v406, %v1200
  %vm1251 = vcmp.eq.s32.totalorder %v406, %v1239
  %vm1252 = vcmp.eq.s32.totalorder %v407, %v1122
  %vm1253 = vcmp.eq.s32.totalorder %v407, %v1161
  %vm1254 = vcmp.eq.s32.totalorder %v407, %v1200
  %vm1255 = vcmp.eq.s32.totalorder %v407, %v1239
  %vm1256 = vcmp.eq.s32.totalorder %v408, %v1122
  %vm1257 = vcmp.eq.s32.totalorder %v408, %v1161
  %vm1258 = vcmp.eq.s32.totalorder %v408, %v1200
  %vm1259 = vcmp.eq.s32.totalorder %v408, %v1239
  %vm1260 = vcmp.eq.s32.totalorder %v409, %v1122
  %vm1261 = vcmp.eq.s32.totalorder %v409, %v1161
  %vm1262 = vcmp.eq.s32.totalorder %v409, %v1200
  %vm1263 = vcmp.eq.s32.totalorder %v409, %v1239
  %vm1264 = vcmp.eq.s32.totalorder %v410, %v1122
  %vm1265 = vcmp.eq.s32.totalorder %v410, %v1161
  %vm1266 = vcmp.eq.s32.totalorder %v410, %v1200
  %vm1267 = vcmp.eq.s32.totalorder %v410, %v1239
  %vm1268 = vcmp.eq.s32.totalorder %v411, %v1122
  %vm1269 = vcmp.eq.s32.totalorder %v411, %v1161
  %vm1270 = vcmp.eq.s32.totalorder %v411, %v1200
  %vm1271 = vcmp.eq.s32.totalorder %v411, %v1239
  %vm1272 = vcmp.eq.s32.totalorder %v412, %v1122
  %vm1273 = vcmp.eq.s32.totalorder %v412, %v1161
  %vm1274 = vcmp.eq.s32.totalorder %v412, %v1200
  %vm1275 = vcmp.eq.s32.totalorder %v412, %v1239
  %vm1276 = vcmp.eq.s32.totalorder %v413, %v1122
  %vm1277 = vcmp.eq.s32.totalorder %v413, %v1161
  %vm1278 = vcmp.eq.s32.totalorder %v413, %v1200
  %vm1279 = vcmp.eq.s32.totalorder %v413, %v1239
  %vm1280 = vcmp.eq.s32.totalorder %v414, %v1122
  %vm1281 = vcmp.eq.s32.totalorder %v414, %v1161
  %vm1282 = vcmp.eq.s32.totalorder %v414, %v1200
  %vm1283 = vcmp.eq.s32.totalorder %v414, %v1239
  %vm1284 = vcmp.eq.s32.totalorder %v415, %v1122
  %vm1285 = vcmp.eq.s32.totalorder %v415, %v1161
  %vm1286 = vcmp.eq.s32.totalorder %v415, %v1200
  %vm1287 = vcmp.eq.s32.totalorder %v415, %v1239
  %vm1288 = vcmp.eq.s32.totalorder %v416, %v1122
  %vm1289 = vcmp.eq.s32.totalorder %v416, %v1161
  %vm1290 = vcmp.eq.s32.totalorder %v416, %v1200
  %vm1291 = vcmp.eq.s32.totalorder %v416, %v1239
  %vm1292 = vcmp.eq.s32.totalorder %v417, %v1122
  %vm1293 = vcmp.eq.s32.totalorder %v417, %v1161
  %vm1294 = vcmp.eq.s32.totalorder %v417, %v1200
  %vm1295 = vcmp.eq.s32.totalorder %v417, %v1239
  %vm1296 = vcmp.eq.s32.totalorder %v418, %v1122
  %vm1297 = vcmp.eq.s32.totalorder %v418, %v1161
  %vm1298 = vcmp.eq.s32.totalorder %v418, %v1200
  %vm1299 = vcmp.eq.s32.totalorder %v418, %v1239
  %vm1300 = vcmp.eq.s32.totalorder %v419, %v1122
  %vm1301 = vcmp.eq.s32.totalorder %v419, %v1161
  %vm1302 = vcmp.eq.s32.totalorder %v419, %v1200
  %vm1303 = vcmp.eq.s32.totalorder %v419, %v1239
  %v1304 = vsel %vm1240, 1, 0
  %v1305 = vsel %vm1241, 1, 0
  %v1306 = vsel %vm1242, 1, 0
  %v1307 = vsel %vm1243, 1, 0
  %v1308 = vsel %vm1244, 1, 0
  %v1309 = vsel %vm1245, 1, 0
  %v1310 = vsel %vm1246, 1, 0
  %v1311 = vsel %vm1247, 1, 0
  %v1312 = vsel %vm1248, 1, 0
  %v1313 = vsel %vm1249, 1, 0
  %v1314 = vsel %vm1250, 1, 0
  %v1315 = vsel %vm1251, 1, 0
  %v1316 = vsel %vm1252, 1, 0
  %v1317 = vsel %vm1253, 1, 0
  %v1318 = vsel %vm1254, 1, 0
  %v1319 = vsel %vm1255, 1, 0
  %v1320 = vsel %vm1256, 1, 0
  %v1321 = vsel %vm1257, 1, 0
  %v1322 = vsel %vm1258, 1, 0
  %v1323 = vsel %vm1259, 1, 0
  %v1324 = vsel %vm1260, 1, 0
  %v1325 = vsel %vm1261, 1, 0
  %v1326 = vsel %vm1262, 1, 0
  %v1327 = vsel %vm1263, 1, 0
  %v1328 = vsel %vm1264, 1, 0
  %v1329 = vsel %vm1265, 1, 0
  %v1330 = vsel %vm1266, 1, 0
  %v1331 = vsel %vm1267, 1, 0
  %v1332 = vsel %vm1268, 1, 0
  %v1333 = vsel %vm1269, 1, 0
  %v1334 = vsel %vm1270, 1, 0
  %v1335 = vsel %vm1271, 1, 0
  %v1336 = vsel %vm1272, 1, 0
  %v1337 = vsel %vm1273, 1, 0
  %v1338 = vsel %vm1274, 1, 0
  %v1339 = vsel %vm1275, 1, 0
  %v1340 = vsel %vm1276, 1, 0
  %v1341 = vsel %vm1277, 1, 0
  %v1342 = vsel %vm1278, 1, 0
  %v1343 = vsel %vm1279, 1, 0
  %v1344 = vsel %vm1280, 1, 0
  %v1345 = vsel %vm1281, 1, 0
  %v1346 = vsel %vm1282, 1, 0
  %v1347 = vsel %vm1283, 1, 0
  %v1348 = vsel %vm1284, 1, 0
  %v1349 = vsel %vm1285, 1, 0
  %v1350 = vsel %vm1286, 1, 0
  %v1351 = vsel %vm1287, 1, 0
  %v1352 = vsel %vm1288, 1, 0
  %v1353 = vsel %vm1289, 1, 0
  %v1354 = vsel %vm1290, 1, 0
  %v1355 = vsel %vm1291, 1, 0
  %v1356 = vsel %vm1292, 1, 0
  %v1357 = vsel %vm1293, 1, 0
  %v1358 = vsel %vm1294, 1, 0
  %v1359 = vsel %vm1295, 1, 0
  %v1360 = vsel %vm1296, 1, 0
  %v1361 = vsel %vm1297, 1, 0
  %v1362 = vsel %vm1298, 1, 0
  %v1363 = vsel %vm1299, 1, 0
  %v1364 = vsel %vm1300, 1, 0
  %v1365 = vsel %vm1301, 1, 0
  %v1366 = vsel %vm1302, 1, 0
  %v1367 = vsel %vm1303, 1, 0
  %v1368 = vcvt.s32.f32 %v1304
  %v1369 = vcvt.s32.f32 %v1305
  %v1370 = vcvt.s32.f32 %v1306
  %v1371 = vcvt.s32.f32 %v1307
  %v1372 = vcvt.s32.f32 %v1308
  %v1373 = vcvt.s32.f32 %v1309
  %v1374 = vcvt.s32.f32 %v1310
  %v1375 = vcvt.s32.f32 %v1311
  %v1376 = vcvt.s32.f32 %v1312
  %v1377 = vcvt.s32.f32 %v1313
  %v1378 = vcvt.s32.f32 %v1314
  %v1379 = vcvt.s32.f32 %v1315
  %v1380 = vcvt.s32.f32 %v1316
  %v1381 = vcvt.s32.f32 %v1317
  %v1382 = vcvt.s32.f32 %v1318
  %v1383 = vcvt.s32.f32 %v1319
  %v1384 = vcvt.s32.f32 %v1320
  %v1385 = vcvt.s32.f32 %v1321
  %v1386 = vcvt.s32.f32 %v1322
  %v1387 = vcvt.s32.f32 %v1323
  %v1388 = vcvt.s32.f32 %v1324
  %v1389 = vcvt.s32.f32 %v1325
  %v1390 = vcvt.s32.f32 %v1326
  %v1391 = vcvt.s32.f32 %v1327
  %v1392 = vcvt.s32.f32 %v1328
  %v1393 = vcvt.s32.f32 %v1329
  %v1394 = vcvt.s32.f32 %v1330
  %v1395 = vcvt.s32.f32 %v1331
  %v1396 = vcvt.s32.f32 %v1332
  %v1397 = vcvt.s32.f32 %v1333
  %v1398 = vcvt.s32.f32 %v1334
  %v1399 = vcvt.s32.f32 %v1335
  %v1400 = vcvt.s32.f32 %v1336
  %v1401 = vcvt.s32.f32 %v1337
  %v1402 = vcvt.s32.f32 %v1338
  %v1403 = vcvt.s32.f32 %v1339
  %v1404 = vcvt.s32.f32 %v1340
  %v1405 = vcvt.s32.f32 %v1341
  %v1406 = vcvt.s32.f32 %v1342
  %v1407 = vcvt.s32.f32 %v1343
  %v1408 = vcvt.s32.f32 %v1344
  %v1409 = vcvt.s32.f32 %v1345
  %v1410 = vcvt.s32.f32 %v1346
  %v1411 = vcvt.s32.f32 %v1347
  %v1412 = vcvt.s32.f32 %v1348
  %v1413 = vcvt.s32.f32 %v1349
  %v1414 = vcvt.s32.f32 %v1350
  %v1415 = vcvt.s32.f32 %v1351
  %v1416 = vcvt.s32.f32 %v1352
  %v1417 = vcvt.s32.f32 %v1353
  %v1418 = vcvt.s32.f32 %v1354
  %v1419 = vcvt.s32.f32 %v1355
  %v1420 = vcvt.s32.f32 %v1356
  %v1421 = vcvt.s32.f32 %v1357
  %v1422 = vcvt.s32.f32 %v1358
  %v1423 = vcvt.s32.f32 %v1359
  %v1424 = vcvt.s32.f32 %v1360
  %v1425 = vcvt.s32.f32 %v1361
  %v1426 = vcvt.s32.f32 %v1362
  %v1427 = vcvt.s32.f32 %v1363
  %v1428 = vcvt.s32.f32 %v1364
  %v1429 = vcvt.s32.f32 %v1365
  %v1430 = vcvt.s32.f32 %v1366
  %v1431 = vcvt.s32.f32 %v1367
  %1432 = vmatpush.msra.mxu0 %v1428
  %1433 = vmatpush.msra.mxu0 %v1424
  %1434 = vmatpush.msra.mxu0 %v1420
  %1435 = vmatpush.msra.mxu0 %v1416
  %1436 = vmatpush.msra.mxu0 %v1412
  %1437 = vmatpush.msra.mxu0 %v1408
  %1438 = vmatpush.msra.mxu0 %v1404
  %1439 = vmatpush.msra.mxu0 %v1400
  %1440 = vmatpush.msra.mxu0 %v1396
  %1441 = vmatpush.msra.mxu0 %v1392
  %1442 = vmatpush.msra.mxu0 %v1388
  %1443 = vmatpush.msra.mxu0 %v1384
  %1444 = vmatpush.msra.mxu0 %v1380
  %1445 = vmatpush.msra.mxu0 %v1376
  %1446 = vmatpush.msra.mxu0 %v1372
  %1447 = vmatpush.msra.mxu0 %v1368
  %1448 = vmatmul.f32.gmra.mxu0 %v383
  %v1449 = vpop.f32.mrf.mxu0
  %v1450 = vadd.f32 0.0, %v1449
  %1451 = vmatmul.f32.gmra.mxu0 %v384
  %v1452 = vpop.f32.mrf.mxu0
  %v1453 = vadd.f32 0.0, %v1452
  %1454 = vmatmul.f32.gmra.mxu0 %v385
  %v1455 = vpop.f32.mrf.mxu0
  %v1456 = vadd.f32 0.0, %v1455
  %1457 = vmatmul.f32.gmra.mxu0 %v386
  %v1458 = vpop.f32.mrf.mxu0
  %v1459 = vadd.f32 0.0, %v1458
  %1460 = vdwg.mxu0
  %1461 = vmatpush.msra.mxu0 %v1429
  %1462 = vmatpush.msra.mxu0 %v1425
  %1463 = vmatpush.msra.mxu0 %v1421
  %1464 = vmatpush.msra.mxu0 %v1417
  %1465 = vmatpush.msra.mxu0 %v1413
  %1466 = vmatpush.msra.mxu0 %v1409
  %1467 = vmatpush.msra.mxu0 %v1405
  %1468 = vmatpush.msra.mxu0 %v1401
  %1469 = vmatpush.msra.mxu0 %v1397
  %1470 = vmatpush.msra.mxu0 %v1393
  %1471 = vmatpush.msra.mxu0 %v1389
  %1472 = vmatpush.msra.mxu0 %v1385
  %1473 = vmatpush.msra.mxu0 %v1381
  %1474 = vmatpush.msra.mxu0 %v1377
  %1475 = vmatpush.msra.mxu0 %v1373
  %1476 = vmatpush.msra.mxu0 %v1369
  %1477 = vmatmul.f32.gmra.mxu0 %v383
  %v1478 = vpop.f32.mrf.mxu0
  %v1479 = vadd.f32 0.0, %v1478
  %1480 = vmatmul.f32.gmra.mxu0 %v384
  %v1481 = vpop.f32.mrf.mxu0
  %v1482 = vadd.f32 0.0, %v1481
  %1483 = vmatmul.f32.gmra.mxu0 %v385
  %v1484 = vpop.f32.mrf.mxu0
  %v1485 = vadd.f32 0.0, %v1484
  %1486 = vmatmul.f32.gmra.mxu0 %v386
  %v1487 = vpop.f32.mrf.mxu0
  %v1488 = vadd.f32 0.0, %v1487
  %1489 = vdwg.mxu0
  %1490 = vmatpush.msra.mxu0 %v1430
  %1491 = vmatpush.msra.mxu0 %v1426
  %1492 = vmatpush.msra.mxu0 %v1422
  %1493 = vmatpush.msra.mxu0 %v1418
  %1494 = vmatpush.msra.mxu0 %v1414
  %1495 = vmatpush.msra.mxu0 %v1410
  %1496 = vmatpush.msra.mxu0 %v1406
  %1497 = vmatpush.msra.mxu0 %v1402
  %1498 = vmatpush.msra.mxu0 %v1398
  %1499 = vmatpush.msra.mxu0 %v1394
  %1500 = vmatpush.msra.mxu0 %v1390
  %1501 = vmatpush.msra.mxu0 %v1386
  %1502 = vmatpush.msra.mxu0 %v1382
  %1503 = vmatpush.msra.mxu0 %v1378
  %1504 = vmatpush.msra.mxu0 %v1374
  %1505 = vmatpush.msra.mxu0 %v1370
  %1506 = vmatmul.f32.gmra.mxu0 %v383
  %v1507 = vpop.f32.mrf.mxu0
  %v1508 = vadd.f32 0.0, %v1507
  %1509 = vmatmul.f32.gmra.mxu0 %v384
  %v1510 = vpop.f32.mrf.mxu0
  %v1511 = vadd.f32 0.0, %v1510
  %1512 = vmatmul.f32.gmra.mxu0 %v385
  %v1513 = vpop.f32.mrf.mxu0
  %v1514 = vadd.f32 0.0, %v1513
  %1515 = vmatmul.f32.gmra.mxu0 %v386
  %v1516 = vpop.f32.mrf.mxu0
  %v1517 = vadd.f32 0.0, %v1516
  %1518 = vdwg.mxu0
  %1519 = vmatpush.msra.mxu0 %v1431
  %1520 = vmatpush.msra.mxu0 %v1427
  %1521 = vmatpush.msra.mxu0 %v1423
  %1522 = vmatpush.msra.mxu0 %v1419
  %1523 = vmatpush.msra.mxu0 %v1415
  %1524 = vmatpush.msra.mxu0 %v1411
  %1525 = vmatpush.msra.mxu0 %v1407
  %1526 = vmatpush.msra.mxu0 %v1403
  %1527 = vmatpush.msra.mxu0 %v1399
  %1528 = vmatpush.msra.mxu0 %v1395
  %1529 = vmatpush.msra.mxu0 %v1391
  %1530 = vmatpush.msra.mxu0 %v1387
  %1531 = vmatpush.msra.mxu0 %v1383
  %1532 = vmatpush.msra.mxu0 %v1379
  %1533 = vmatpush.msra.mxu0 %v1375
  %1534 = vmatpush.msra.mxu0 %v1371
  %1535 = vmatmul.f32.gmra.mxu0 %v383
  %v1536 = vpop.f32.mrf.mxu0
  %v1537 = vadd.f32 0.0, %v1536
  %1538 = vmatmul.f32.gmra.mxu0 %v384
  %v1539 = vpop.f32.mrf.mxu0
  %v1540 = vadd.f32 0.0, %v1539
  %1541 = vmatmul.f32.gmra.mxu0 %v385
  %v1542 = vpop.f32.mrf.mxu0
  %v1543 = vadd.f32 0.0, %v1542
  %1544 = vmatmul.f32.gmra.mxu0 %v386
  %v1545 = vpop.f32.mrf.mxu0
  %v1546 = vadd.f32 0.0, %v1545
  %1547 = vdwg.mxu0
  %v1548 = vsub.f32 %v269, %v1450
  %v1549 = vsub.f32 %v298, %v1479
  %v1550 = vsub.f32 %v327, %v1508
  %v1551 = vsub.f32 %v356, %v1537
  %v1552 = vsub.f32 %v272, %v1453
  %v1553 = vsub.f32 %v301, %v1482
  %v1554 = vsub.f32 %v330, %v1511
  %v1555 = vsub.f32 %v359, %v1540
  %v1556 = vsub.f32 %v275, %v1456
  %v1557 = vsub.f32 %v304, %v1485
  %v1558 = vsub.f32 %v333, %v1514
  %v1559 = vsub.f32 %v362, %v1543
  %v1560 = vsub.f32 %v278, %v1459
  %v1561 = vsub.f32 %v307, %v1488
  %v1562 = vsub.f32 %v336, %v1517
  %v1563 = vsub.f32 %v365, %v1546
  %1564 = vmatpush.msra.mxu0 0.0
  %1565 = vmatpush.msra.mxu0 0.0
  %1566 = vmatpush.msra.mxu0 0.0
  %1567 = vmatpush.msra.mxu0 0.0
  %1568 = vmatpush.msra.mxu0 0.0
  %1569 = vmatpush.msra.mxu0 0.0
  %1570 = vmatpush.msra.mxu0 0.0
  %1571 = vmatpush.msra.mxu0 0.0
  %1572 = vmatpush.msra.mxu0 0.0
  %1573 = vmatpush.msra.mxu0 0.0
  %1574 = vmatpush.msra.mxu0 0.0
  %1575 = vmatpush.msra.mxu0 0.0
  %1576 = vmatpush.msra.mxu0 %v1560
  %1577 = vmatpush.msra.mxu0 %v1556
  %1578 = vmatpush.msra.mxu0 %v1552
  %1579 = vmatpush.msra.mxu0 %v1548
  %1580 = vmatmul.f32.gmra.mxu0 %v421
  %v1581 = vpop.f32.mrf.mxu0
  %v1582 = vadd.f32 0.0, %v1581
  %1583 = vmatmul.f32.gmra.mxu0 %v424
  %v1584 = vpop.f32.mrf.mxu0
  %v1585 = vadd.f32 0.0, %v1584
  %1586 = vmatmul.f32.gmra.mxu0 %v427
  %v1587 = vpop.f32.mrf.mxu0
  %v1588 = vadd.f32 0.0, %v1587
  %1589 = vmatmul.f32.gmra.mxu0 %v430
  %v1590 = vpop.f32.mrf.mxu0
  %v1591 = vadd.f32 0.0, %v1590
  %1592 = vmatmul.f32.gmra.mxu0 %v433
  %v1593 = vpop.f32.mrf.mxu0
  %v1594 = vadd.f32 0.0, %v1593
  %1595 = vmatmul.f32.gmra.mxu0 %v436
  %v1596 = vpop.f32.mrf.mxu0
  %v1597 = vadd.f32 0.0, %v1596
  %1598 = vmatmul.f32.gmra.mxu0 %v439
  %v1599 = vpop.f32.mrf.mxu0
  %v1600 = vadd.f32 0.0, %v1599
  %1601 = vmatmul.f32.gmra.mxu0 %v442
  %v1602 = vpop.f32.mrf.mxu0
  %v1603 = vadd.f32 0.0, %v1602
  %1604 = vmatmul.f32.gmra.mxu0 %v445
  %v1605 = vpop.f32.mrf.mxu0
  %v1606 = vadd.f32 0.0, %v1605
  %1607 = vmatmul.f32.gmra.mxu0 %v448
  %v1608 = vpop.f32.mrf.mxu0
  %v1609 = vadd.f32 0.0, %v1608
  %1610 = vmatmul.f32.gmra.mxu0 %v451
  %v1611 = vpop.f32.mrf.mxu0
  %v1612 = vadd.f32 0.0, %v1611
  %1613 = vmatmul.f32.gmra.mxu0 %v454
  %v1614 = vpop.f32.mrf.mxu0
  %v1615 = vadd.f32 0.0, %v1614
  %1616 = vmatmul.f32.gmra.mxu0 %v457
  %v1617 = vpop.f32.mrf.mxu0
  %v1618 = vadd.f32 0.0, %v1617
  %1619 = vmatmul.f32.gmra.mxu0 %v460
  %v1620 = vpop.f32.mrf.mxu0
  %v1621 = vadd.f32 0.0, %v1620
  %1622 = vmatmul.f32.gmra.mxu0 %v463
  %v1623 = vpop.f32.mrf.mxu0
  %v1624 = vadd.f32 0.0, %v1623
  %1625 = vmatmul.f32.gmra.mxu0 %v466
  %v1626 = vpop.f32.mrf.mxu0
  %v1627 = vadd.f32 0.0, %v1626
  %1628 = vdwg.mxu0
  %1629 = vmatpush.msra.mxu0 0.0
  %1630 = vmatpush.msra.mxu0 0.0
  %1631 = vmatpush.msra.mxu0 0.0
  %1632 = vmatpush.msra.mxu0 0.0
  %1633 = vmatpush.msra.mxu0 0.0
  %1634 = vmatpush.msra.mxu0 0.0
  %1635 = vmatpush.msra.mxu0 0.0
  %1636 = vmatpush.msra.mxu0 0.0
  %1637 = vmatpush.msra.mxu0 0.0
  %1638 = vmatpush.msra.mxu0 0.0
  %1639 = vmatpush.msra.mxu0 0.0
  %1640 = vmatpush.msra.mxu0 0.0
  %1641 = vmatpush.msra.mxu0 %v1561
  %1642 = vmatpush.msra.mxu0 %v1557
  %1643 = vmatpush.msra.mxu0 %v1553
  %1644 = vmatpush.msra.mxu0 %v1549
  %1645 = vmatmul.f32.gmra.mxu0 %v421
  %v1646 = vpop.f32.mrf.mxu0
  %v1647 = vadd.f32 0.0, %v1646
  %1648 = vmatmul.f32.gmra.mxu0 %v424
  %v1649 = vpop.f32.mrf.mxu0
  %v1650 = vadd.f32 0.0, %v1649
  %1651 = vmatmul.f32.gmra.mxu0 %v427
  %v1652 = vpop.f32.mrf.mxu0
  %v1653 = vadd.f32 0.0, %v1652
  %1654 = vmatmul.f32.gmra.mxu0 %v430
  %v1655 = vpop.f32.mrf.mxu0
  %v1656 = vadd.f32 0.0, %v1655
  %1657 = vmatmul.f32.gmra.mxu0 %v433
  %v1658 = vpop.f32.mrf.mxu0
  %v1659 = vadd.f32 0.0, %v1658
  %1660 = vmatmul.f32.gmra.mxu0 %v436
  %v1661 = vpop.f32.mrf.mxu0
  %v1662 = vadd.f32 0.0, %v1661
  %1663 = vmatmul.f32.gmra.mxu0 %v439
  %v1664 = vpop.f32.mrf.mxu0
  %v1665 = vadd.f32 0.0, %v1664
  %1666 = vmatmul.f32.gmra.mxu0 %v442
  %v1667 = vpop.f32.mrf.mxu0
  %v1668 = vadd.f32 0.0, %v1667
  %1669 = vmatmul.f32.gmra.mxu0 %v445
  %v1670 = vpop.f32.mrf.mxu0
  %v1671 = vadd.f32 0.0, %v1670
  %1672 = vmatmul.f32.gmra.mxu0 %v448
  %v1673 = vpop.f32.mrf.mxu0
  %v1674 = vadd.f32 0.0, %v1673
  %1675 = vmatmul.f32.gmra.mxu0 %v451
  %v1676 = vpop.f32.mrf.mxu0
  %v1677 = vadd.f32 0.0, %v1676
  %1678 = vmatmul.f32.gmra.mxu0 %v454
  %v1679 = vpop.f32.mrf.mxu0
  %v1680 = vadd.f32 0.0, %v1679
  %1681 = vmatmul.f32.gmra.mxu0 %v457
  %v1682 = vpop.f32.mrf.mxu0
  %v1683 = vadd.f32 0.0, %v1682
  %1684 = vmatmul.f32.gmra.mxu0 %v460
  %v1685 = vpop.f32.mrf.mxu0
  %v1686 = vadd.f32 0.0, %v1685
  %1687 = vmatmul.f32.gmra.mxu0 %v463
  %v1688 = vpop.f32.mrf.mxu0
  %v1689 = vadd.f32 0.0, %v1688
  %1690 = vmatmul.f32.gmra.mxu0 %v466
  %v1691 = vpop.f32.mrf.mxu0
  %v1692 = vadd.f32 0.0, %v1691
  %1693 = vdwg.mxu0
  %1694 = vmatpush.msra.mxu0 0.0
  %1695 = vmatpush.msra.mxu0 0.0
  %1696 = vmatpush.msra.mxu0 0.0
  %1697 = vmatpush.msra.mxu0 0.0
  %1698 = vmatpush.msra.mxu0 0.0
  %1699 = vmatpush.msra.mxu0 0.0
  %1700 = vmatpush.msra.mxu0 0.0
  %1701 = vmatpush.msra.mxu0 0.0
  %1702 = vmatpush.msra.mxu0 0.0
  %1703 = vmatpush.msra.mxu0 0.0
  %1704 = vmatpush.msra.mxu0 0.0
  %1705 = vmatpush.msra.mxu0 0.0
  %1706 = vmatpush.msra.mxu0 %v1562
  %1707 = vmatpush.msra.mxu0 %v1558
  %1708 = vmatpush.msra.mxu0 %v1554
  %1709 = vmatpush.msra.mxu0 %v1550
  %1710 = vmatmul.f32.gmra.mxu0 %v421
  %v1711 = vpop.f32.mrf.mxu0
  %v1712 = vadd.f32 0.0, %v1711
  %1713 = vmatmul.f32.gmra.mxu0 %v424
  %v1714 = vpop.f32.mrf.mxu0
  %v1715 = vadd.f32 0.0, %v1714
  %1716 = vmatmul.f32.gmra.mxu0 %v427
  %v1717 = vpop.f32.mrf.mxu0
  %v1718 = vadd.f32 0.0, %v1717
  %1719 = vmatmul.f32.gmra.mxu0 %v430
  %v1720 = vpop.f32.mrf.mxu0
  %v1721 = vadd.f32 0.0, %v1720
  %1722 = vmatmul.f32.gmra.mxu0 %v433
  %v1723 = vpop.f32.mrf.mxu0
  %v1724 = vadd.f32 0.0, %v1723
  %1725 = vmatmul.f32.gmra.mxu0 %v436
  %v1726 = vpop.f32.mrf.mxu0
  %v1727 = vadd.f32 0.0, %v1726
  %1728 = vmatmul.f32.gmra.mxu0 %v439
  %v1729 = vpop.f32.mrf.mxu0
  %v1730 = vadd.f32 0.0, %v1729
  %1731 = vmatmul.f32.gmra.mxu0 %v442
  %v1732 = vpop.f32.mrf.mxu0
  %v1733 = vadd.f32 0.0, %v1732
  %1734 = vmatmul.f32.gmra.mxu0 %v445
  %v1735 = vpop.f32.mrf.mxu0
  %v1736 = vadd.f32 0.0, %v1735
  %1737 = vmatmul.f32.gmra.mxu0 %v448
  %v1738 = vpop.f32.mrf.mxu0
  %v1739 = vadd.f32 0.0, %v1738
  %1740 = vmatmul.f32.gmra.mxu0 %v451
  %v1741 = vpop.f32.mrf.mxu0
  %v1742 = vadd.f32 0.0, %v1741
  %1743 = vmatmul.f32.gmra.mxu0 %v454
  %v1744 = vpop.f32.mrf.mxu0
  %v1745 = vadd.f32 0.0, %v1744
  %1746 = vmatmul.f32.gmra.mxu0 %v457
  %v1747 = vpop.f32.mrf.mxu0
  %v1748 = vadd.f32 0.0, %v1747
  %1749 = vmatmul.f32.gmra.mxu0 %v460
  %v1750 = vpop.f32.mrf.mxu0
  %v1751 = vadd.f32 0.0, %v1750
  %1752 = vmatmul.f32.gmra.mxu0 %v463
  %v1753 = vpop.f32.mrf.mxu0
  %v1754 = vadd.f32 0.0, %v1753
  %1755 = vmatmul.f32.gmra.mxu0 %v466
  %v1756 = vpop.f32.mrf.mxu0
  %v1757 = vadd.f32 0.0, %v1756
  %1758 = vdwg.mxu0
  %1759 = vmatpush.msra.mxu0 0.0
  %1760 = vmatpush.msra.mxu0 0.0
  %1761 = vmatpush.msra.mxu0 0.0
  %1762 = vmatpush.msra.mxu0 0.0
  %1763 = vmatpush.msra.mxu0 0.0
  %1764 = vmatpush.msra.mxu0 0.0
  %1765 = vmatpush.msra.mxu0 0.0
  %1766 = vmatpush.msra.mxu0 0.0
  %1767 = vmatpush.msra.mxu0 0.0
  %1768 = vmatpush.msra.mxu0 0.0
  %1769 = vmatpush.msra.mxu0 0.0
  %1770 = vmatpush.msra.mxu0 0.0
  %1771 = vmatpush.msra.mxu0 %v1563
  %1772 = vmatpush.msra.mxu0 %v1559
  %1773 = vmatpush.msra.mxu0 %v1555
  %1774 = vmatpush.msra.mxu0 %v1551
  %1775 = vmatmul.f32.gmra.mxu0 %v421
  %v1776 = vpop.f32.mrf.mxu0
  %v1777 = vadd.f32 0.0, %v1776
  %1778 = vmatmul.f32.gmra.mxu0 %v424
  %v1779 = vpop.f32.mrf.mxu0
  %v1780 = vadd.f32 0.0, %v1779
  %1781 = vmatmul.f32.gmra.mxu0 %v427
  %v1782 = vpop.f32.mrf.mxu0
  %v1783 = vadd.f32 0.0, %v1782
  %1784 = vmatmul.f32.gmra.mxu0 %v430
  %v1785 = vpop.f32.mrf.mxu0
  %v1786 = vadd.f32 0.0, %v1785
  %1787 = vmatmul.f32.gmra.mxu0 %v433
  %v1788 = vpop.f32.mrf.mxu0
  %v1789 = vadd.f32 0.0, %v1788
  %1790 = vmatmul.f32.gmra.mxu0 %v436
  %v1791 = vpop.f32.mrf.mxu0
  %v1792 = vadd.f32 0.0, %v1791
  %1793 = vmatmul.f32.gmra.mxu0 %v439
  %v1794 = vpop.f32.mrf.mxu0
  %v1795 = vadd.f32 0.0, %v1794
  %1796 = vmatmul.f32.gmra.mxu0 %v442
  %v1797 = vpop.f32.mrf.mxu0
  %v1798 = vadd.f32 0.0, %v1797
  %1799 = vmatmul.f32.gmra.mxu0 %v445
  %v1800 = vpop.f32.mrf.mxu0
  %v1801 = vadd.f32 0.0, %v1800
  %1802 = vmatmul.f32.gmra.mxu0 %v448
  %v1803 = vpop.f32.mrf.mxu0
  %v1804 = vadd.f32 0.0, %v1803
  %1805 = vmatmul.f32.gmra.mxu0 %v451
  %v1806 = vpop.f32.mrf.mxu0
  %v1807 = vadd.f32 0.0, %v1806
  %1808 = vmatmul.f32.gmra.mxu0 %v454
  %v1809 = vpop.f32.mrf.mxu0
  %v1810 = vadd.f32 0.0, %v1809
  %1811 = vmatmul.f32.gmra.mxu0 %v457
  %v1812 = vpop.f32.mrf.mxu0
  %v1813 = vadd.f32 0.0, %v1812
  %1814 = vmatmul.f32.gmra.mxu0 %v460
  %v1815 = vpop.f32.mrf.mxu0
  %v1816 = vadd.f32 0.0, %v1815
  %1817 = vmatmul.f32.gmra.mxu0 %v463
  %v1818 = vpop.f32.mrf.mxu0
  %v1819 = vadd.f32 0.0, %v1818
  %1820 = vmatmul.f32.gmra.mxu0 %v466
  %v1821 = vpop.f32.mrf.mxu0
  %v1822 = vadd.f32 0.0, %v1821
  %1823 = vdwg.mxu0
  %v1824 = vadd.f32 %v731, %v1582
  %v1825 = vadd.f32 %v731, %v1647
  %v1826 = vadd.f32 %v731, %v1712
  %v1827 = vadd.f32 %v731, %v1777
  %v1828 = vadd.f32 %v736, %v1585
  %v1829 = vadd.f32 %v736, %v1650
  %v1830 = vadd.f32 %v736, %v1715
  %v1831 = vadd.f32 %v736, %v1780
  %v1832 = vadd.f32 %v741, %v1588
  %v1833 = vadd.f32 %v741, %v1653
  %v1834 = vadd.f32 %v741, %v1718
  %v1835 = vadd.f32 %v741, %v1783
  %v1836 = vadd.f32 %v746, %v1591
  %v1837 = vadd.f32 %v746, %v1656
  %v1838 = vadd.f32 %v746, %v1721
  %v1839 = vadd.f32 %v746, %v1786
  %v1840 = vadd.f32 %v751, %v1594
  %v1841 = vadd.f32 %v751, %v1659
  %v1842 = vadd.f32 %v751, %v1724
  %v1843 = vadd.f32 %v751, %v1789
  %v1844 = vadd.f32 %v756, %v1597
  %v1845 = vadd.f32 %v756, %v1662
  %v1846 = vadd.f32 %v756, %v1727
  %v1847 = vadd.f32 %v756, %v1792
  %v1848 = vadd.f32 %v761, %v1600
  %v1849 = vadd.f32 %v761, %v1665
  %v1850 = vadd.f32 %v761, %v1730
  %v1851 = vadd.f32 %v761, %v1795
  %v1852 = vadd.f32 %v766, %v1603
  %v1853 = vadd.f32 %v766, %v1668
  %v1854 = vadd.f32 %v766, %v1733
  %v1855 = vadd.f32 %v766, %v1798
  %v1856 = vadd.f32 %v771, %v1606
  %v1857 = vadd.f32 %v771, %v1671
  %v1858 = vadd.f32 %v771, %v1736
  %v1859 = vadd.f32 %v771, %v1801
  %v1860 = vadd.f32 %v776, %v1609
  %v1861 = vadd.f32 %v776, %v1674
  %v1862 = vadd.f32 %v776, %v1739
  %v1863 = vadd.f32 %v776, %v1804
  %v1864 = vadd.f32 %v781, %v1612
  %v1865 = vadd.f32 %v781, %v1677
  %v1866 = vadd.f32 %v781, %v1742
  %v1867 = vadd.f32 %v781, %v1807
  %v1868 = vadd.f32 %v786, %v1615
  %v1869 = vadd.f32 %v786, %v1680
  %v1870 = vadd.f32 %v786, %v1745
  %v1871 = vadd.f32 %v786, %v1810
  %v1872 = vadd.f32 %v791, %v1618
  %v1873 = vadd.f32 %v791, %v1683
  %v1874 = vadd.f32 %v791, %v1748
  %v1875 = vadd.f32 %v791, %v1813
  %v1876 = vadd.f32 %v796, %v1621
  %v1877 = vadd.f32 %v796, %v1686
  %v1878 = vadd.f32 %v796, %v1751
  %v1879 = vadd.f32 %v796, %v1816
  %v1880 = vadd.f32 %v801, %v1624
  %v1881 = vadd.f32 %v801, %v1689
  %v1882 = vadd.f32 %v801, %v1754
  %v1883 = vadd.f32 %v801, %v1819
  %v1884 = vadd.f32 %v806, %v1627
  %v1885 = vadd.f32 %v806, %v1692
  %v1886 = vadd.f32 %v806, %v1757
  %v1887 = vadd.f32 %v806, %v1822
  %v1888 = vmin.f32 %v1824, %v1828
  %v1889 = vmin.f32 %v1888, %v1832
  %v1890 = vmin.f32 %v1889, %v1836
  %v1891 = vmin.f32 %v1890, %v1840
  %v1892 = vmin.f32 %v1891, %v1844
  %v1893 = vmin.f32 %v1892, %v1848
  %v1894 = vmin.f32 %v1893, %v1852
  %v1895 = vmin.f32 %v1894, %v1856
  %v1896 = vmin.f32 %v1895, %v1860
  %v1897 = vmin.f32 %v1896, %v1864
  %v1898 = vmin.f32 %v1897, %v1868
  %v1899 = vmin.f32 %v1898, %v1872
  %v1900 = vmin.f32 %v1899, %v1876
  %v1901 = vmin.f32 %v1900, %v1880
  %v1902 = vmin.f32 %v1901, %v1884
  %v1903 = vrot.slane %v1902, 4
  %v1904 = vmin.f32 %v1902, %v1903
  %v1905 = vrot.slane %v1904, 2
  %v1906 = vmin.f32 %v1904, %v1905
  %v1907 = vrot.slane %v1906, 1
  %v1908 = vmin.f32 %v1906, %v1907
  %v1909 = vmin.f32 %v1825, %v1829
  %v1910 = vmin.f32 %v1909, %v1833
  %v1911 = vmin.f32 %v1910, %v1837
  %v1912 = vmin.f32 %v1911, %v1841
  %v1913 = vmin.f32 %v1912, %v1845
  %v1914 = vmin.f32 %v1913, %v1849
  %v1915 = vmin.f32 %v1914, %v1853
  %v1916 = vmin.f32 %v1915, %v1857
  %v1917 = vmin.f32 %v1916, %v1861
  %v1918 = vmin.f32 %v1917, %v1865
  %v1919 = vmin.f32 %v1918, %v1869
  %v1920 = vmin.f32 %v1919, %v1873
  %v1921 = vmin.f32 %v1920, %v1877
  %v1922 = vmin.f32 %v1921, %v1881
  %v1923 = vmin.f32 %v1922, %v1885
  %v1924 = vrot.slane %v1923, 4
  %v1925 = vmin.f32 %v1923, %v1924
  %v1926 = vrot.slane %v1925, 2
  %v1927 = vmin.f32 %v1925, %v1926
  %v1928 = vrot.slane %v1927, 1
  %v1929 = vmin.f32 %v1927, %v1928
  %v1930 = vmin.f32 %v1826, %v1830
  %v1931 = vmin.f32 %v1930, %v1834
  %v1932 = vmin.f32 %v1931, %v1838
  %v1933 = vmin.f32 %v1932, %v1842
  %v1934 = vmin.f32 %v1933, %v1846
  %v1935 = vmin.f32 %v1934, %v1850
  %v1936 = vmin.f32 %v1935, %v1854
  %v1937 = vmin.f32 %v1936, %v1858
  %v1938 = vmin.f32 %v1937, %v1862
  %v1939 = vmin.f32 %v1938, %v1866
  %v1940 = vmin.f32 %v1939, %v1870
  %v1941 = vmin.f32 %v1940, %v1874
  %v1942 = vmin.f32 %v1941, %v1878
  %v1943 = vmin.f32 %v1942, %v1882
  %v1944 = vmin.f32 %v1943, %v1886
  %v1945 = vrot.slane %v1944, 4
  %v1946 = vmin.f32 %v1944, %v1945
  %v1947 = vrot.slane %v1946, 2
  %v1948 = vmin.f32 %v1946, %v1947
  %v1949 = vrot.slane %v1948, 1
  %v1950 = vmin.f32 %v1948, %v1949
  %v1951 = vmin.f32 %v1827, %v1831
  %v1952 = vmin.f32 %v1951, %v1835
  %v1953 = vmin.f32 %v1952, %v1839
  %v1954 = vmin.f32 %v1953, %v1843
  %v1955 = vmin.f32 %v1954, %v1847
  %v1956 = vmin.f32 %v1955, %v1851
  %v1957 = vmin.f32 %v1956, %v1855
  %v1958 = vmin.f32 %v1957, %v1859
  %v1959 = vmin.f32 %v1958, %v1863
  %v1960 = vmin.f32 %v1959, %v1867
  %v1961 = vmin.f32 %v1960, %v1871
  %v1962 = vmin.f32 %v1961, %v1875
  %v1963 = vmin.f32 %v1962, %v1879
  %v1964 = vmin.f32 %v1963, %v1883
  %v1965 = vmin.f32 %v1964, %v1887
  %v1966 = vrot.slane %v1965, 4
  %v1967 = vmin.f32 %v1965, %v1966
  %v1968 = vrot.slane %v1967, 2
  %v1969 = vmin.f32 %v1967, %v1968
  %v1970 = vrot.slane %v1969, 1
  %v1971 = vmin.f32 %v1969, %v1970
  %vm1972 = vcmp.le.f32.partialorder %v1824, %v1908
  %vm1973 = vcmp.le.f32.partialorder %v1825, %v1929
  %vm1974 = vcmp.le.f32.partialorder %v1826, %v1950
  %vm1975 = vcmp.le.f32.partialorder %v1827, %v1971
  %vm1976 = vcmp.le.f32.partialorder %v1828, %v1908
  %vm1977 = vcmp.le.f32.partialorder %v1829, %v1929
  %vm1978 = vcmp.le.f32.partialorder %v1830, %v1950
  %vm1979 = vcmp.le.f32.partialorder %v1831, %v1971
  %vm1980 = vcmp.le.f32.partialorder %v1832, %v1908
  %vm1981 = vcmp.le.f32.partialorder %v1833, %v1929
  %vm1982 = vcmp.le.f32.partialorder %v1834, %v1950
  %vm1983 = vcmp.le.f32.partialorder %v1835, %v1971
  %vm1984 = vcmp.le.f32.partialorder %v1836, %v1908
  %vm1985 = vcmp.le.f32.partialorder %v1837, %v1929
  %vm1986 = vcmp.le.f32.partialorder %v1838, %v1950
  %vm1987 = vcmp.le.f32.partialorder %v1839, %v1971
  %vm1988 = vcmp.le.f32.partialorder %v1840, %v1908
  %vm1989 = vcmp.le.f32.partialorder %v1841, %v1929
  %vm1990 = vcmp.le.f32.partialorder %v1842, %v1950
  %vm1991 = vcmp.le.f32.partialorder %v1843, %v1971
  %vm1992 = vcmp.le.f32.partialorder %v1844, %v1908
  %vm1993 = vcmp.le.f32.partialorder %v1845, %v1929
  %vm1994 = vcmp.le.f32.partialorder %v1846, %v1950
  %vm1995 = vcmp.le.f32.partialorder %v1847, %v1971
  %vm1996 = vcmp.le.f32.partialorder %v1848, %v1908
  %vm1997 = vcmp.le.f32.partialorder %v1849, %v1929
  %vm1998 = vcmp.le.f32.partialorder %v1850, %v1950
  %vm1999 = vcmp.le.f32.partialorder %v1851, %v1971
  %vm2000 = vcmp.le.f32.partialorder %v1852, %v1908
  %vm2001 = vcmp.le.f32.partialorder %v1853, %v1929
  %vm2002 = vcmp.le.f32.partialorder %v1854, %v1950
  %vm2003 = vcmp.le.f32.partialorder %v1855, %v1971
  %vm2004 = vcmp.le.f32.partialorder %v1856, %v1908
  %vm2005 = vcmp.le.f32.partialorder %v1857, %v1929
  %vm2006 = vcmp.le.f32.partialorder %v1858, %v1950
  %vm2007 = vcmp.le.f32.partialorder %v1859, %v1971
  %vm2008 = vcmp.le.f32.partialorder %v1860, %v1908
  %vm2009 = vcmp.le.f32.partialorder %v1861, %v1929
  %vm2010 = vcmp.le.f32.partialorder %v1862, %v1950
  %vm2011 = vcmp.le.f32.partialorder %v1863, %v1971
  %vm2012 = vcmp.le.f32.partialorder %v1864, %v1908
  %vm2013 = vcmp.le.f32.partialorder %v1865, %v1929
  %vm2014 = vcmp.le.f32.partialorder %v1866, %v1950
  %vm2015 = vcmp.le.f32.partialorder %v1867, %v1971
  %vm2016 = vcmp.le.f32.partialorder %v1868, %v1908
  %vm2017 = vcmp.le.f32.partialorder %v1869, %v1929
  %vm2018 = vcmp.le.f32.partialorder %v1870, %v1950
  %vm2019 = vcmp.le.f32.partialorder %v1871, %v1971
  %vm2020 = vcmp.le.f32.partialorder %v1872, %v1908
  %vm2021 = vcmp.le.f32.partialorder %v1873, %v1929
  %vm2022 = vcmp.le.f32.partialorder %v1874, %v1950
  %vm2023 = vcmp.le.f32.partialorder %v1875, %v1971
  %vm2024 = vcmp.le.f32.partialorder %v1876, %v1908
  %vm2025 = vcmp.le.f32.partialorder %v1877, %v1929
  %vm2026 = vcmp.le.f32.partialorder %v1878, %v1950
  %vm2027 = vcmp.le.f32.partialorder %v1879, %v1971
  %vm2028 = vcmp.le.f32.partialorder %v1880, %v1908
  %vm2029 = vcmp.le.f32.partialorder %v1881, %v1929
  %vm2030 = vcmp.le.f32.partialorder %v1882, %v1950
  %vm2031 = vcmp.le.f32.partialorder %v1883, %v1971
  %vm2032 = vcmp.le.f32.partialorder %v1884, %v1908
  %vm2033 = vcmp.le.f32.partialorder %v1885, %v1929
  %vm2034 = vcmp.le.f32.partialorder %v1886, %v1950
  %vm2035 = vcmp.le.f32.partialorder %v1887, %v1971
  %v2036 = vsel %vm1972, %v404, 128
  %v2037 = vsel %vm1973, %v404, 128
  %v2038 = vsel %vm1974, %v404, 128
  %v2039 = vsel %vm1975, %v404, 128
  %v2040 = vsel %vm1976, %v405, 128
  %v2041 = vsel %vm1977, %v405, 128
  %v2042 = vsel %vm1978, %v405, 128
  %v2043 = vsel %vm1979, %v405, 128
  %v2044 = vsel %vm1980, %v406, 128
  %v2045 = vsel %vm1981, %v406, 128
  %v2046 = vsel %vm1982, %v406, 128
  %v2047 = vsel %vm1983, %v406, 128
  %v2048 = vsel %vm1984, %v407, 128
  %v2049 = vsel %vm1985, %v407, 128
  %v2050 = vsel %vm1986, %v407, 128
  %v2051 = vsel %vm1987, %v407, 128
  %v2052 = vsel %vm1988, %v408, 128
  %v2053 = vsel %vm1989, %v408, 128
  %v2054 = vsel %vm1990, %v408, 128
  %v2055 = vsel %vm1991, %v408, 128
  %v2056 = vsel %vm1992, %v409, 128
  %v2057 = vsel %vm1993, %v409, 128
  %v2058 = vsel %vm1994, %v409, 128
  %v2059 = vsel %vm1995, %v409, 128
  %v2060 = vsel %vm1996, %v410, 128
  %v2061 = vsel %vm1997, %v410, 128
  %v2062 = vsel %vm1998, %v410, 128
  %v2063 = vsel %vm1999, %v410, 128
  %v2064 = vsel %vm2000, %v411, 128
  %v2065 = vsel %vm2001, %v411, 128
  %v2066 = vsel %vm2002, %v411, 128
  %v2067 = vsel %vm2003, %v411, 128
  %v2068 = vsel %vm2004, %v412, 128
  %v2069 = vsel %vm2005, %v412, 128
  %v2070 = vsel %vm2006, %v412, 128
  %v2071 = vsel %vm2007, %v412, 128
  %v2072 = vsel %vm2008, %v413, 128
  %v2073 = vsel %vm2009, %v413, 128
  %v2074 = vsel %vm2010, %v413, 128
  %v2075 = vsel %vm2011, %v413, 128
  %v2076 = vsel %vm2012, %v414, 128
  %v2077 = vsel %vm2013, %v414, 128
  %v2078 = vsel %vm2014, %v414, 128
  %v2079 = vsel %vm2015, %v414, 128
  %v2080 = vsel %vm2016, %v415, 128
  %v2081 = vsel %vm2017, %v415, 128
  %v2082 = vsel %vm2018, %v415, 128
  %v2083 = vsel %vm2019, %v415, 128
  %v2084 = vsel %vm2020, %v416, 128
  %v2085 = vsel %vm2021, %v416, 128
  %v2086 = vsel %vm2022, %v416, 128
  %v2087 = vsel %vm2023, %v416, 128
  %v2088 = vsel %vm2024, %v417, 128
  %v2089 = vsel %vm2025, %v417, 128
  %v2090 = vsel %vm2026, %v417, 128
  %v2091 = vsel %vm2027, %v417, 128
  %v2092 = vsel %vm2028, %v418, 128
  %v2093 = vsel %vm2029, %v418, 128
  %v2094 = vsel %vm2030, %v418, 128
  %v2095 = vsel %vm2031, %v418, 128
  %v2096 = vsel %vm2032, %v419, 128
  %v2097 = vsel %vm2033, %v419, 128
  %v2098 = vsel %vm2034, %v419, 128
  %v2099 = vsel %vm2035, %v419, 128
  %vm2100 = vcmp.lt.s32.totalorder %v2036, %v2040
  %v2101 = vsel %vm2100, %v2036, %v2040
  %vm2102 = vcmp.lt.s32.totalorder %v2101, %v2044
  %v2103 = vsel %vm2102, %v2101, %v2044
  %vm2104 = vcmp.lt.s32.totalorder %v2103, %v2048
  %v2105 = vsel %vm2104, %v2103, %v2048
  %vm2106 = vcmp.lt.s32.totalorder %v2105, %v2052
  %v2107 = vsel %vm2106, %v2105, %v2052
  %vm2108 = vcmp.lt.s32.totalorder %v2107, %v2056
  %v2109 = vsel %vm2108, %v2107, %v2056
  %vm2110 = vcmp.lt.s32.totalorder %v2109, %v2060
  %v2111 = vsel %vm2110, %v2109, %v2060
  %vm2112 = vcmp.lt.s32.totalorder %v2111, %v2064
  %v2113 = vsel %vm2112, %v2111, %v2064
  %vm2114 = vcmp.lt.s32.totalorder %v2113, %v2068
  %v2115 = vsel %vm2114, %v2113, %v2068
  %vm2116 = vcmp.lt.s32.totalorder %v2115, %v2072
  %v2117 = vsel %vm2116, %v2115, %v2072
  %vm2118 = vcmp.lt.s32.totalorder %v2117, %v2076
  %v2119 = vsel %vm2118, %v2117, %v2076
  %vm2120 = vcmp.lt.s32.totalorder %v2119, %v2080
  %v2121 = vsel %vm2120, %v2119, %v2080
  %vm2122 = vcmp.lt.s32.totalorder %v2121, %v2084
  %v2123 = vsel %vm2122, %v2121, %v2084
  %vm2124 = vcmp.lt.s32.totalorder %v2123, %v2088
  %v2125 = vsel %vm2124, %v2123, %v2088
  %vm2126 = vcmp.lt.s32.totalorder %v2125, %v2092
  %v2127 = vsel %vm2126, %v2125, %v2092
  %vm2128 = vcmp.lt.s32.totalorder %v2127, %v2096
  %v2129 = vsel %vm2128, %v2127, %v2096
  %v2130 = vrot.slane %v2129, 4
  %vm2131 = vcmp.lt.s32.totalorder %v2129, %v2130
  %v2132 = vsel %vm2131, %v2129, %v2130
  %v2133 = vrot.slane %v2132, 2
  %vm2134 = vcmp.lt.s32.totalorder %v2132, %v2133
  %v2135 = vsel %vm2134, %v2132, %v2133
  %v2136 = vrot.slane %v2135, 1
  %vm2137 = vcmp.lt.s32.totalorder %v2135, %v2136
  %v2138 = vsel %vm2137, %v2135, %v2136
  %vm2139 = vcmp.lt.s32.totalorder %v2037, %v2041
  %v2140 = vsel %vm2139, %v2037, %v2041
  %vm2141 = vcmp.lt.s32.totalorder %v2140, %v2045
  %v2142 = vsel %vm2141, %v2140, %v2045
  %vm2143 = vcmp.lt.s32.totalorder %v2142, %v2049
  %v2144 = vsel %vm2143, %v2142, %v2049
  %vm2145 = vcmp.lt.s32.totalorder %v2144, %v2053
  %v2146 = vsel %vm2145, %v2144, %v2053
  %vm2147 = vcmp.lt.s32.totalorder %v2146, %v2057
  %v2148 = vsel %vm2147, %v2146, %v2057
  %vm2149 = vcmp.lt.s32.totalorder %v2148, %v2061
  %v2150 = vsel %vm2149, %v2148, %v2061
  %vm2151 = vcmp.lt.s32.totalorder %v2150, %v2065
  %v2152 = vsel %vm2151, %v2150, %v2065
  %vm2153 = vcmp.lt.s32.totalorder %v2152, %v2069
  %v2154 = vsel %vm2153, %v2152, %v2069
  %vm2155 = vcmp.lt.s32.totalorder %v2154, %v2073
  %v2156 = vsel %vm2155, %v2154, %v2073
  %vm2157 = vcmp.lt.s32.totalorder %v2156, %v2077
  %v2158 = vsel %vm2157, %v2156, %v2077
  %vm2159 = vcmp.lt.s32.totalorder %v2158, %v2081
  %v2160 = vsel %vm2159, %v2158, %v2081
  %vm2161 = vcmp.lt.s32.totalorder %v2160, %v2085
  %v2162 = vsel %vm2161, %v2160, %v2085
  %vm2163 = vcmp.lt.s32.totalorder %v2162, %v2089
  %v2164 = vsel %vm2163, %v2162, %v2089
  %vm2165 = vcmp.lt.s32.totalorder %v2164, %v2093
  %v2166 = vsel %vm2165, %v2164, %v2093
  %vm2167 = vcmp.lt.s32.totalorder %v2166, %v2097
  %v2168 = vsel %vm2167, %v2166, %v2097
  %v2169 = vrot.slane %v2168, 4
  %vm2170 = vcmp.lt.s32.totalorder %v2168, %v2169
  %v2171 = vsel %vm2170, %v2168, %v2169
  %v2172 = vrot.slane %v2171, 2
  %vm2173 = vcmp.lt.s32.totalorder %v2171, %v2172
  %v2174 = vsel %vm2173, %v2171, %v2172
  %v2175 = vrot.slane %v2174, 1
  %vm2176 = vcmp.lt.s32.totalorder %v2174, %v2175
  %v2177 = vsel %vm2176, %v2174, %v2175
  %vm2178 = vcmp.lt.s32.totalorder %v2038, %v2042
  %v2179 = vsel %vm2178, %v2038, %v2042
  %vm2180 = vcmp.lt.s32.totalorder %v2179, %v2046
  %v2181 = vsel %vm2180, %v2179, %v2046
  %vm2182 = vcmp.lt.s32.totalorder %v2181, %v2050
  %v2183 = vsel %vm2182, %v2181, %v2050
  %vm2184 = vcmp.lt.s32.totalorder %v2183, %v2054
  %v2185 = vsel %vm2184, %v2183, %v2054
  %vm2186 = vcmp.lt.s32.totalorder %v2185, %v2058
  %v2187 = vsel %vm2186, %v2185, %v2058
  %vm2188 = vcmp.lt.s32.totalorder %v2187, %v2062
  %v2189 = vsel %vm2188, %v2187, %v2062
  %vm2190 = vcmp.lt.s32.totalorder %v2189, %v2066
  %v2191 = vsel %vm2190, %v2189, %v2066
  %vm2192 = vcmp.lt.s32.totalorder %v2191, %v2070
  %v2193 = vsel %vm2192, %v2191, %v2070
  %vm2194 = vcmp.lt.s32.totalorder %v2193, %v2074
  %v2195 = vsel %vm2194, %v2193, %v2074
  %vm2196 = vcmp.lt.s32.totalorder %v2195, %v2078
  %v2197 = vsel %vm2196, %v2195, %v2078
  %vm2198 = vcmp.lt.s32.totalorder %v2197, %v2082
  %v2199 = vsel %vm2198, %v2197, %v2082
  %vm2200 = vcmp.lt.s32.totalorder %v2199, %v2086
  %v2201 = vsel %vm2200, %v2199, %v2086
  %vm2202 = vcmp.lt.s32.totalorder %v2201, %v2090
  %v2203 = vsel %vm2202, %v2201, %v2090
  %vm2204 = vcmp.lt.s32.totalorder %v2203, %v2094
  %v2205 = vsel %vm2204, %v2203, %v2094
  %vm2206 = vcmp.lt.s32.totalorder %v2205, %v2098
  %v2207 = vsel %vm2206, %v2205, %v2098
  %v2208 = vrot.slane %v2207, 4
  %vm2209 = vcmp.lt.s32.totalorder %v2207, %v2208
  %v2210 = vsel %vm2209, %v2207, %v2208
  %v2211 = vrot.slane %v2210, 2
  %vm2212 = vcmp.lt.s32.totalorder %v2210, %v2211
  %v2213 = vsel %vm2212, %v2210, %v2211
  %v2214 = vrot.slane %v2213, 1
  %vm2215 = vcmp.lt.s32.totalorder %v2213, %v2214
  %v2216 = vsel %vm2215, %v2213, %v2214
  %vm2217 = vcmp.lt.s32.totalorder %v2039, %v2043
  %v2218 = vsel %vm2217, %v2039, %v2043
  %vm2219 = vcmp.lt.s32.totalorder %v2218, %v2047
  %v2220 = vsel %vm2219, %v2218, %v2047
  %vm2221 = vcmp.lt.s32.totalorder %v2220, %v2051
  %v2222 = vsel %vm2221, %v2220, %v2051
  %vm2223 = vcmp.lt.s32.totalorder %v2222, %v2055
  %v2224 = vsel %vm2223, %v2222, %v2055
  %vm2225 = vcmp.lt.s32.totalorder %v2224, %v2059
  %v2226 = vsel %vm2225, %v2224, %v2059
  %vm2227 = vcmp.lt.s32.totalorder %v2226, %v2063
  %v2228 = vsel %vm2227, %v2226, %v2063
  %vm2229 = vcmp.lt.s32.totalorder %v2228, %v2067
  %v2230 = vsel %vm2229, %v2228, %v2067
  %vm2231 = vcmp.lt.s32.totalorder %v2230, %v2071
  %v2232 = vsel %vm2231, %v2230, %v2071
  %vm2233 = vcmp.lt.s32.totalorder %v2232, %v2075
  %v2234 = vsel %vm2233, %v2232, %v2075
  %vm2235 = vcmp.lt.s32.totalorder %v2234, %v2079
  %v2236 = vsel %vm2235, %v2234, %v2079
  %vm2237 = vcmp.lt.s32.totalorder %v2236, %v2083
  %v2238 = vsel %vm2237, %v2236, %v2083
  %vm2239 = vcmp.lt.s32.totalorder %v2238, %v2087
  %v2240 = vsel %vm2239, %v2238, %v2087
  %vm2241 = vcmp.lt.s32.totalorder %v2240, %v2091
  %v2242 = vsel %vm2241, %v2240, %v2091
  %vm2243 = vcmp.lt.s32.totalorder %v2242, %v2095
  %v2244 = vsel %vm2243, %v2242, %v2095
  %vm2245 = vcmp.lt.s32.totalorder %v2244, %v2099
  %v2246 = vsel %vm2245, %v2244, %v2099
  %v2247 = vrot.slane %v2246, 4
  %vm2248 = vcmp.lt.s32.totalorder %v2246, %v2247
  %v2249 = vsel %vm2248, %v2246, %v2247
  %v2250 = vrot.slane %v2249, 2
  %vm2251 = vcmp.lt.s32.totalorder %v2249, %v2250
  %v2252 = vsel %vm2251, %v2249, %v2250
  %v2253 = vrot.slane %v2252, 1
  %vm2254 = vcmp.lt.s32.totalorder %v2252, %v2253
  %v2255 = vsel %vm2254, %v2252, %v2253
  %vm2256 = vcmask 1040384
  %v2257 = vsel %vm2256, %v1122, %v2138
  %v2258 = vsel %vm2256, %v1161, %v2177
  %v2259 = vsel %vm2256, %v1200, %v2216
  %v2260 = vsel %vm2256, %v1239, %v2255
  %v2261 = vrot.slane %v2258, 6
  %v2262 = vrot.slane %v2259, 4
  %v2263 = vrot.slane %v2260, 2
  %vm2264 = vcmask 1041408
  %v2265 = vsel %vm2264, %v2257, %v2261
  %vm2266 = vcmask 1045508
  %v2267 = vsel %vm2266, %v2262, %v2263
  %vm2268 = vcmask 1043456
  %v2269 = vsel %vm2268, %v2265, %v2267
  %2270 = vst [vmem:[%s8] sm:$0xff] %v2269
  // Predicated region
  $region34: #{rvq_get_indices.1} parent=0 // pred_check
    _
  $region35: #{rvq_get_indices.1} parent=0 // pred_check_branch
    %2272 = sbr.rel (0) target = $region37
  $region36: #{rvq_get_indices.1} parent=0 // pred_region
    _
  $region37: #{rvq_get_indices.1} parent=0 // pred_fallthru
    _
  // Predicated region
  $region38: #{rvq_get_indices.1} parent=0 // pred_check
    _
  $region39: #{rvq_get_indices.1} parent=0 // pred_check_branch
    %2274 = sbr.rel (0) target = $region41
  $region40: #{rvq_get_indices.1} parent=0 // pred_region
    _
  $region41: #{rvq_get_indices.1} parent=0 // pred_fallthru
    _

</llo_original>
